<compile_context>
chip_gen: v5e
topology: v5e:2x2
jax: 0.10.0
libtpu: 0.0.40
codegen_flags: <defaults>
</compile_context>

<pallas_src>
import functools

import jax
import jax.numpy as jnp
from jax.experimental import pallas as pl
from jax.experimental.pallas import tpu as pltpu


# ----------------------------- configuration -------------------------------
EMBED_DIM = 16
ATTEN_DIM = 64
NUM_HEADS = 2
HEAD_DIM = ATTEN_DIM // NUM_HEADS
SCALE_ATT = False        # module default
RELU_BEFORE_ATT = False  # module default
USE_RESIDUAL = True      # module default (residual=True)

# MXU operand dtype for the big fused projection.  bf16 halves operand bytes in
# VMEM/DMA and uses the native bf16 MXU rate on v6e/v7x; operands are pre-cast
# ONCE in the wrapper so the kernel body does no casting.  Accumulation is f32
# (preferred_element_type) and all softmax/exp/centering math stays f32.  The
# tiny scores / attention@V matmuls are kept in f32 (exp amplifies operand
# error and they are not on the perf critical path at these shapes).
MXU_DTYPE = jnp.bfloat16

# Fused projection column layout: [Wr | Wq | Wk | Wv | Wu | 0-pad] -> 384 lanes.
NW_PAD = ((4 * ATTEN_DIM + NUM_HEADS + 127) // 128) * 128
# Output padded to a multiple of 128 lanes so the final store is unmasked.
OUT_LANES = ((ATTEN_DIM + 127) // 128) * 128

_VMEM_BUDGET_BYTES = 16 * 1024 * 1024   # conservative: fits every generation's scoped default


# ------------------------------- Pallas kernel ------------------------------
def _dsa_kernel(qkv_ref, w_ref, b_ref, out_ref, *, tb, seq):
    A, H, hd = ATTEN_DIM, NUM_HEADS, HEAD_DIM
    f32 = jnp.float32

    # ---- single fused block-diagonal projection: 1 MXU sequence, K=3E, N=384.
    # qkv and W arrive pre-cast to MXU_DTYPE; bias stays f32.
    x = jnp.dot(qkv_ref[...], w_ref[...], preferred_element_type=f32) + b_ref[...]
    # seq is a multiple of 8 here, so this reshape is a free sublane retile.
    x3 = x.reshape(tb, seq, NW_PAD)

    res = x3[:, :, 0:A]                # residual projection (lane offset 0)
    qp = x3[:, :, A:2 * A]             # query projection
    kp = x3[:, :, 2 * A:3 * A]         # key projection
    vp = x3[:, :, 3 * A:4 * A]         # value projection
    u = x3[:, :, 4 * A:4 * A + H]      # unary logits  [tb, S, H]

    if RELU_BEFORE_ATT:
        qp = jnp.maximum(qp, 0.0)
        kp = jnp.maximum(kp, 0.0)
        vp = jnp.maximum(vp, 0.0)

    # ---- unary term: softmax over the *sequence* axis (per batch, per head) -
    u = u - jnp.max(u, axis=1, keepdims=True)
    ue = jnp.exp(u)
    un = ue * pl.reciprocal(jnp.sum(ue, axis=1, keepdims=True), approx=True)

    # ---- per-head mean-centering over seq (heads are disjoint lane blocks, so
    #      a per-column mean over seq equals the reference's per-head mean). ---
    qc = qp - jnp.mean(qp, axis=1, keepdims=True)
    kc = kp - jnp.mean(kp, axis=1, keepdims=True)

    # ---- fold heads into the batch axis (head-major, like torch.cat(dim=0)) --
    fold = lambda t: jnp.concatenate(
        [t[:, :, h * hd:(h + 1) * hd] for h in range(H)], axis=0)   # [H*tb, S, hd]
    qh, kh, vh = fold(qc), fold(kc), fold(vp)
    ub = jnp.concatenate([un[:, :, h] for h in range(H)], axis=0)   # [H*tb, S]

    # ---- ONE batched scores matmul + ONE softmax chain for all heads ---------
    s = jnp.einsum('bqd,bkd->bqk', qh, kh, preferred_element_type=f32)
    if SCALE_ATT:
        s = s * (1.0 / (hd ** 0.5))
    s = s - jnp.max(s, axis=2, keepdims=True)
    e = jnp.exp(s)
    p = e * pl.reciprocal(jnp.sum(e, axis=2, keepdims=True), approx=True)

    # unary[k] broadcasts over the query axis.
    att = p + ub[:, None, :]                                        # [H*tb, S, S]
    # TODO(synk): dropout > 0 would apply a PRNG mask to `att` here.

    # ---- ONE batched attention @ V (exact per-head outputs) ------------------
    o = jnp.einsum('bqk,bkd->bqd', att, vh, preferred_element_type=f32)

    # ---- un-fold heads back onto the lane axis, add the residual -------------
    o = jnp.concatenate([o[h * tb:(h + 1) * tb] for h in range(H)], axis=2)
    acc = o + res if USE_RESIDUAL else o                            # [tb, S, A]

    # ---- lane-dense store: pad to 128 lanes -> unmasked vst ------------------
    if OUT_LANES > A:
        pad = jnp.zeros((tb, seq, OUT_LANES - A), f32)
        acc = jnp.concatenate([acc, pad], axis=-1)
    out_ref[...] = acc.astype(out_ref.dtype)


# --------------------------------- wrapper ----------------------------------
def _tensorcores_per_chip():
    """2 TensorCores per chip on v7x, 1 on v5e/v6e. Conservative fallback: 1."""
    try:
        kind = jax.devices()[0].device_kind.lower()
    except Exception:
        return 1
    return 2 if ("v7" in kind or "7x" in kind) else 1


def _vmem_bytes_estimate(tb, seq, embed, nw):
    """Rough per-step VMEM footprint (buffers + main intermediates)."""
    mxu = jnp.dtype(MXU_DTYPE).itemsize
    act = 2 * tb * seq * 3 * embed * mxu            # double-buffered qkv block
    wgt = 2 * (3 * embed * nw * mxu + nw * 4)       # fused weight + bias
    out = 2 * tb * seq * OUT_LANES * 4              # double-buffered padded output
    proj = tb * seq * nw * 4                        # f32 projection result
    scores = 4 * tb * NUM_HEADS * seq * seq * 4     # s / exp / probs / att
    misc = 6 * tb * seq * ATTEN_DIM * 4             # qc/kc/folded q,k,v/out
    return act + wgt + out + proj + scores + misc


def _choose_batch_tile(batch, seq, embed, nw, cores):
    """Generation-aware batch tile.

    Single-TC chips (v5e/v6e): one grid step (each extra step costs ~0.35us of
    pipeline overhead and halves the MXU row count), VMEM budget permitting.
    v7x (2 TCs): at least `cores` grid steps so CORE_PARALLEL can split them
    across both TensorCores.
    """
    tb = batch if cores <= 1 else max(1, batch // cores)
    while batch % tb:
        tb -= 1
    while tb > 1 and _vmem_bytes_estimate(tb, seq, embed, nw) > _VMEM_BUDGET_BYTES:
        tb -= 1
        while batch % tb:
            tb -= 1
    # Keep the (tb*S, 3E) activation block's sublane dim legal when tiled.
    if tb != batch and (tb * seq) % 8:
        tb = batch
    return tb


def _fused_projection(params, E):
    """Block-diagonal fused weight [3E, NW_PAD] and bias [1, NW_PAD].

    Column layout: [Wr | Wq | Wk | Wv | Wu | 0-pad]; rows are the q / k / v
    blocks of the concatenated activation.  The residual sits at lane offset 0
    (it is the tensor carried through to the final store).
    """
    A, H = ATTEN_DIM, NUM_HEADS
    pad = NW_PAD - (4 * A + H)
    z = lambda r, c: jnp.zeros((r, c), jnp.float32)
    row_q = jnp.concatenate(
        [params["wr"], params["wq"], z(E, A), z(E, A), z(E, H), z(E, pad)], axis=1)
    row_k = jnp.concatenate(
        [z(E, A), z(E, A), params["wk"], z(E, A), params["wu"], z(E, pad)], axis=1)
    row_v = jnp.concatenate(
        [z(E, A), z(E, A), z(E, A), params["wv"], z(E, H), z(E, pad)], axis=1)
    w = jnp.concatenate([row_q, row_k, row_v], axis=0).astype(MXU_DTYPE)
    b = jnp.concatenate(
        [params["br"], params["bq"], params["bk"], params["bv"], params["bu"],
         z(1, pad)], axis=1)                                    # bias stays f32
    return w, b


@functools.partial(jax.jit, static_argnames=("batch_tile", "cores_per_chip"))
def disentangled_self_attention(query, key, value, params, *,
                                batch_tile=None, cores_per_chip=None):
    B, S, E = query.shape
    A = ATTEN_DIM

    cores = _tensorcores_per_chip() if cores_per_chip is None else cores_per_chip
    tb = (batch_tile if batch_tile is not None
          else _choose_batch_tile(B, S, E, NW_PAD, cores))
    assert B % tb == 0, "batch_tile must divide batch"
    steps = B // tb

    # q|k|v concatenated on the lane axis: one [B*S, 3E] activation stream
    # (3x denser LHS lanes for the single fused projection matmul).
    qkv = jnp.concatenate([query, key, value], axis=-1).reshape(B * S, 3 * E)
    qkv = qkv.astype(MXU_DTYPE)

    w, b = _fused_projection(params, E)

    kernel = functools.partial(_dsa_kernel, tb=tb, seq=S)

    # Only CORE_PARALLEL actually splits grid steps across v7x's 2 TensorCores;
    # on single-TC chips (grid of 1) the semantics are irrelevant.
    if steps > 1 and cores > 1:
        semantics = (pltpu.CORE_PARALLEL,)
    else:
        semantics = (pltpu.ARBITRARY,)

    out = pl.pallas_call(
        kernel,
        out_shape=jax.ShapeDtypeStruct((B, S, OUT_LANES), jnp.float32),
        grid=(steps,),
        in_specs=[
            pl.BlockSpec((tb * S, 3 * E), lambda i: (i, 0)),   # activations
            pl.BlockSpec((3 * E, NW_PAD), lambda i: (0, 0)),   # fused weight (resident)
            pl.BlockSpec((1, NW_PAD), lambda i: (0, 0)),       # fused bias (resident)
        ],
        out_specs=pl.BlockSpec((tb, S, OUT_LANES), lambda i: (i, 0, 0)),
        compiler_params=pltpu.CompilerParams(
            dimension_semantics=semantics,
            vmem_limit_bytes=32 * 1024 * 1024),
    )(qkv, w, b)

    # Lane-dense (128-wide) store inside the kernel; slice back to atten_dim.
    return out[:, :, :A]


# --------------------------- pure-JAX reference -----------------------------
def reference(query, key, value, params):
    """Literal translation of the PyTorch forward (module defaults)."""
    H = NUM_HEADS
    qp = query @ params["wq"] + params["bq"][0]
    kp = key @ params["wk"] + params["bk"][0]
    vp = value @ params["wv"] + params["bv"][0]
    if RELU_BEFORE_ATT:
        qp, kp, vp = map(jax.nn.relu, (qp, kp, vp))

    to_heads = lambda x: jnp.concatenate(jnp.split(x, H, axis=2), axis=0)
    Q_, K_, V_ = to_heads(qp), to_heads(kp), to_heads(vp)
    Q_ = Q_ - jnp.mean(Q_, axis=1, keepdims=True)
    K_ = K_ - jnp.mean(K_, axis=1, keepdims=True)
    scores = jnp.einsum("bqd,bkd->bqk", Q_, K_)
    if SCALE_ATT:
        scores = scores / (K_.shape[-1] ** 0.5)
    pairwise = jax.nn.softmax(scores, axis=2)

    u = jax.nn.softmax(key @ params["wu"] + params["bu"][0], axis=1)  # [B,S,H]
    unary = jnp.concatenate(jnp.split(u, H, axis=2), axis=0)          # [H*B,S,1]
    unary = jnp.transpose(unary, (0, 2, 1))                           # [H*B,1,S]

    out = jnp.einsum("bqk,bkd->bqd", pairwise + unary, V_)            # [H*B,S,hd]
    out = jnp.concatenate(jnp.split(out, H, axis=0), axis=2)          # [B,S,A]
    if USE_RESIDUAL:
        out = out + (query @ params["wr"] + params["br"][0])
    return out


# ----------------------------------- main ------------------------------------
if __name__ == "__main__":
    B, S, E, A = 8, 8, EMBED_DIM, ATTEN_DIM

    key0 = jax.random.PRNGKey(0)
    keys = jax.random.split(key0, 13)

    # Deterministic synthetic parameters (Linear shapes from __init__),
    # stored as [in, out]; biases kept 2-D (1, out).
    params = {
        "wq": 0.1 * jax.random.normal(keys[0], (E, A), jnp.float32),
        "bq": 0.1 * jax.random.normal(keys[1], (1, A), jnp.float32),
        "wk": 0.1 * jax.random.normal(keys[2], (E, A), jnp.float32),
        "bk": 0.1 * jax.random.normal(keys[3], (1, A), jnp.float32),
        "wv": 0.1 * jax.random.normal(keys[4], (E, A), jnp.float32),
        "bv": 0.1 * jax.random.normal(keys[5], (1, A), jnp.float32),
        "wu": 0.1 * jax.random.normal(keys[6], (E, NUM_HEADS), jnp.float32),
        "bu": 0.1 * jax.random.normal(keys[7], (1, NUM_HEADS), jnp.float32),
        "wr": 0.1 * jax.random.normal(keys[8], (E, A), jnp.float32),
        "br": 0.1 * jax.random.normal(keys[9], (1, A), jnp.float32),
    }

    query = jax.random.normal(keys[10], (B, S, E), jnp.float32)
    key_in = jax.random.normal(keys[11], (B, S, E), jnp.float32)
    value = jax.random.normal(keys[12], (B, S, E), jnp.float32)

    out = disentangled_self_attention(query, key_in, value, params)
    out = jax.block_until_ready(out)

    ref = reference(query, key_in, value, params)
    assert out.shape == (B, S, A)
    # Tolerance covers the intentional bf16 MXU operands of the fused
    # projection (accumulation is f32) plus the EUP approximate reciprocals
    # used for both softmax denominators; the reference is exact f32.
    assert jnp.allclose(out, ref, rtol=2e-2, atol=3e-2), "mismatch vs reference"

    print("KERNEL_OK")
</pallas_src>

<mosaic_0001>
module attributes {stable_mosaic.version = 11 : i64} {
  func.func @_dsa_kernel(%arg0: i32, %arg1: memref<64x48xbf16, #tpu.memory_space<vmem>>, %arg2: memref<48x384xbf16, #tpu.memory_space<vmem>>, %arg3: memref<1x384xf32, #tpu.memory_space<vmem>>, %arg4: memref<8x8x128xf32, #tpu.memory_space<vmem>>) attributes {dimension_semantics = [#tpu.dimension_semantics<arbitrary>], iteration_bounds = array<i64: 1>, scalar_prefetch = 0 : i64, scratch_operands = 0 : i64, tpu.core_type = #tpu.core_type<tc>, window_params = [{transform_indices = @transform_0, window_bounds = array<i64: 64, 48>}, {pipeline_mode = #tpu.pipeline_mode<synchronous>, transform_indices = @transform_1, window_bounds = array<i64: 48, 384>}, {pipeline_mode = #tpu.pipeline_mode<synchronous>, transform_indices = @transform_2, window_bounds = array<i64: 1, 384>}, {transform_indices = @transform_3, window_bounds = array<i64: 8, 8, 128>}]} {
    %c0 = arith.constant 0 : index
    %c0_0 = arith.constant 0 : index
    %0 = vector.load %arg1[%c0, %c0_0] : memref<64x48xbf16, #tpu.memory_space<vmem>>, vector<64x48xbf16>
    %c0_1 = arith.constant 0 : index
    %c0_2 = arith.constant 0 : index
    %1 = vector.load %arg2[%c0_1, %c0_2] : memref<48x384xbf16, #tpu.memory_space<vmem>>, vector<48x384xbf16>
    %cst = arith.constant dense<0.000000e+00> : vector<64x384xf32>
    %2 = tpu.matmul %0, %1, %cst {dimension_numbers = #tpu.dot_dimension_numbers<[1], [0], [0], [1], [0, 0, 1, 1], [], []>} : vector<64x48xbf16>, vector<48x384xbf16>, vector<64x384xf32> -> vector<64x384xf32>
    %c0_3 = arith.constant 0 : index
    %c0_4 = arith.constant 0 : index
    %3 = vector.load %arg3[%c0_3, %c0_4] : memref<1x384xf32, #tpu.memory_space<vmem>>, vector<1x384xf32>
    %4 = vector.broadcast %3 : vector<1x384xf32> to vector<64x384xf32>
    %5 = arith.addf %2, %4 : vector<64x384xf32>
    %6 = vector.shape_cast %5 : vector<64x384xf32> to vector<8x8x384xf32>
    %7 = vector.extract_strided_slice %6 {offsets = [0, 0, 0], sizes = [8, 8, 64], strides = [1, 1, 1]} : vector<8x8x384xf32> to vector<8x8x64xf32>
    %8 = vector.extract_strided_slice %6 {offsets = [0, 0, 64], sizes = [8, 8, 64], strides = [1, 1, 1]} : vector<8x8x384xf32> to vector<8x8x64xf32>
    %9 = vector.extract_strided_slice %6 {offsets = [0, 0, 128], sizes = [8, 8, 64], strides = [1, 1, 1]} : vector<8x8x384xf32> to vector<8x8x64xf32>
    %10 = vector.extract_strided_slice %6 {offsets = [0, 0, 192], sizes = [8, 8, 64], strides = [1, 1, 1]} : vector<8x8x384xf32> to vector<8x8x64xf32>
    %11 = vector.extract_strided_slice %6 {offsets = [0, 0, 256], sizes = [8, 8, 2], strides = [1, 1, 1]} : vector<8x8x384xf32> to vector<8x8x2xf32>
    %cst_5 = arith.constant dense<0xFF800000> : vector<8x2xf32>
    %12 = vector.multi_reduction <maximumf>, %11, %cst_5 [1] : vector<8x8x2xf32> to vector<8x2xf32>
    %13 = vector.shape_cast %12 : vector<8x2xf32> to vector<8x1x2xf32>
    %14 = vector.broadcast %13 : vector<8x1x2xf32> to vector<8x8x2xf32>
    %15 = arith.subf %11, %14 : vector<8x8x2xf32>
    %16 = math.exp %15 : vector<8x8x2xf32>
    %cst_6 = arith.constant dense<0.000000e+00> : vector<8x2xf32>
    %17 = vector.multi_reduction <add>, %16, %cst_6 [1] : vector<8x8x2xf32> to vector<8x2xf32>
    %18 = vector.shape_cast %17 : vector<8x2xf32> to vector<8x1x2xf32>
    %19 = tpu.reciprocal %18 {approx = true} : vector<8x1x2xf32> -> vector<8x1x2xf32>
    %20 = vector.broadcast %19 : vector<8x1x2xf32> to vector<8x8x2xf32>
    %21 = arith.mulf %16, %20 : vector<8x8x2xf32>
    %cst_7 = arith.constant dense<0.000000e+00> : vector<8x64xf32>
    %22 = vector.multi_reduction <add>, %8, %cst_7 [1] : vector<8x8x64xf32> to vector<8x64xf32>
    %23 = vector.shape_cast %22 : vector<8x64xf32> to vector<8x1x64xf32>
    %cst_8 = arith.constant 8.000000e+00 : f32
    %24 = vector.broadcast %cst_8 : f32 to vector<8x1x64xf32>
    %25 = arith.divf %23, %24 : vector<8x1x64xf32>
    %26 = vector.broadcast %25 : vector<8x1x64xf32> to vector<8x8x64xf32>
    %27 = arith.subf %8, %26 : vector<8x8x64xf32>
    %cst_9 = arith.constant dense<0.000000e+00> : vector<8x64xf32>
    %28 = vector.multi_reduction <add>, %9, %cst_9 [1] : vector<8x8x64xf32> to vector<8x64xf32>
    %29 = vector.shape_cast %28 : vector<8x64xf32> to vector<8x1x64xf32>
    %cst_10 = arith.constant 8.000000e+00 : f32
    %30 = vector.broadcast %cst_10 : f32 to vector<8x1x64xf32>
    %31 = arith.divf %29, %30 : vector<8x1x64xf32>
    %32 = vector.broadcast %31 : vector<8x1x64xf32> to vector<8x8x64xf32>
    %33 = arith.subf %9, %32 : vector<8x8x64xf32>
    %34 = vector.extract_strided_slice %27 {offsets = [0, 0, 0], sizes = [8, 8, 32], strides = [1, 1, 1]} : vector<8x8x64xf32> to vector<8x8x32xf32>
    %35 = vector.extract_strided_slice %27 {offsets = [0, 0, 32], sizes = [8, 8, 32], strides = [1, 1, 1]} : vector<8x8x64xf32> to vector<8x8x32xf32>
    %36 = tpu.concatenate %34, %35 in 0 : vector<8x8x32xf32>, vector<8x8x32xf32> -> vector<16x8x32xf32>
    %37 = vector.extract_strided_slice %33 {offsets = [0, 0, 0], sizes = [8, 8, 32], strides = [1, 1, 1]} : vector<8x8x64xf32> to vector<8x8x32xf32>
    %38 = vector.extract_strided_slice %33 {offsets = [0, 0, 32], sizes = [8, 8, 32], strides = [1, 1, 1]} : vector<8x8x64xf32> to vector<8x8x32xf32>
    %39 = tpu.concatenate %37, %38 in 0 : vector<8x8x32xf32>, vector<8x8x32xf32> -> vector<16x8x32xf32>
    %40 = vector.extract_strided_slice %10 {offsets = [0, 0, 0], sizes = [8, 8, 32], strides = [1, 1, 1]} : vector<8x8x64xf32> to vector<8x8x32xf32>
    %41 = vector.extract_strided_slice %10 {offsets = [0, 0, 32], sizes = [8, 8, 32], strides = [1, 1, 1]} : vector<8x8x64xf32> to vector<8x8x32xf32>
    %42 = tpu.concatenate %40, %41 in 0 : vector<8x8x32xf32>, vector<8x8x32xf32> -> vector<16x8x32xf32>
    %43 = vector.extract_strided_slice %21 {offsets = [0, 0, 0], sizes = [8, 8, 1], strides = [1, 1, 1]} : vector<8x8x2xf32> to vector<8x8x1xf32>
    %44 = vector.shape_cast %43 : vector<8x8x1xf32> to vector<8x8xf32>
    %45 = vector.extract_strided_slice %21 {offsets = [0, 0, 1], sizes = [8, 8, 1], strides = [1, 1, 1]} : vector<8x8x2xf32> to vector<8x8x1xf32>
    %46 = vector.shape_cast %45 : vector<8x8x1xf32> to vector<8x8xf32>
    %47 = tpu.concatenate %44, %46 in 0 : vector<8x8xf32>, vector<8x8xf32> -> vector<16x8xf32>
    "tpu.trace_start"() <{level = 10 : i32, message = "bqd,bkd->bqk"}> : () -> ()
    %cst_11 = arith.constant dense<0.000000e+00> : vector<16x8x8xf32>
    %48 = tpu.matmul %36, %39, %cst_11 {dimension_numbers = #tpu.dot_dimension_numbers<[2], [2], [1], [1], [0, 0, 0, 1, 1, 1], [0], [0]>} : vector<16x8x32xf32>, vector<16x8x32xf32>, vector<16x8x8xf32> -> vector<16x8x8xf32>
    "tpu.trace_stop"() : () -> ()
    %cst_12 = arith.constant dense<0xFF800000> : vector<16x8xf32>
    %49 = vector.multi_reduction <maximumf>, %48, %cst_12 [2] : vector<16x8x8xf32> to vector<16x8xf32>
    %50 = vector.shape_cast %49 : vector<16x8xf32> to vector<16x8x1xf32>
    %51 = vector.broadcast %50 : vector<16x8x1xf32> to vector<16x8x8xf32>
    %52 = arith.subf %48, %51 : vector<16x8x8xf32>
    %53 = math.exp %52 : vector<16x8x8xf32>
    %cst_13 = arith.constant dense<0.000000e+00> : vector<16x8xf32>
    %54 = vector.multi_reduction <add>, %53, %cst_13 [2] : vector<16x8x8xf32> to vector<16x8xf32>
    %55 = vector.shape_cast %54 : vector<16x8xf32> to vector<16x8x1xf32>
    %56 = tpu.reciprocal %55 {approx = true} : vector<16x8x1xf32> -> vector<16x8x1xf32>
    %57 = vector.broadcast %56 : vector<16x8x1xf32> to vector<16x8x8xf32>
    %58 = arith.mulf %53, %57 : vector<16x8x8xf32>
    %59 = vector.shape_cast %47 : vector<16x8xf32> to vector<16x1x8xf32>
    %60 = vector.broadcast %59 : vector<16x1x8xf32> to vector<16x8x8xf32>
    %61 = arith.addf %58, %60 : vector<16x8x8xf32>
    "tpu.trace_start"() <{level = 10 : i32, message = "bqk,bkd->bqd"}> : () -> ()
    %cst_14 = arith.constant dense<0.000000e+00> : vector<16x8x32xf32>
    %62 = tpu.matmul %61, %42, %cst_14 {dimension_numbers = #tpu.dot_dimension_numbers<[2], [1], [1], [2], [0, 0, 0, 1, 1, 2], [0], [0]>} : vector<16x8x8xf32>, vector<16x8x32xf32>, vector<16x8x32xf32> -> vector<16x8x32xf32>
    "tpu.trace_stop"() : () -> ()
    %63 = vector.extract_strided_slice %62 {offsets = [0, 0, 0], sizes = [8, 8, 32], strides = [1, 1, 1]} : vector<16x8x32xf32> to vector<8x8x32xf32>
    %64 = vector.extract_strided_slice %62 {offsets = [8, 0, 0], sizes = [8, 8, 32], strides = [1, 1, 1]} : vector<16x8x32xf32> to vector<8x8x32xf32>
    %65 = tpu.concatenate %63, %64 in 2 : vector<8x8x32xf32>, vector<8x8x32xf32> -> vector<8x8x64xf32>
    %66 = arith.addf %65, %7 : vector<8x8x64xf32>
    %cst_15 = arith.constant 0.000000e+00 : f32
    %67 = vector.broadcast %cst_15 : f32 to vector<8x8x64xf32>
    %68 = tpu.concatenate %66, %67 in 2 : vector<8x8x64xf32>, vector<8x8x64xf32> -> vector<8x8x128xf32>
    %c0_16 = arith.constant 0 : index
    %c0_17 = arith.constant 0 : index
    %c0_18 = arith.constant 0 : index
    %69 = vector.load %arg4[%c0_16, %c0_17, %c0_18] : memref<8x8x128xf32, #tpu.memory_space<vmem>>, vector<8x8x128xf32>
    tpu.vector_store %arg4[%c0_16, %c0_17, %c0_18], %68 {strides = array<i32>} : memref<8x8x128xf32, #tpu.memory_space<vmem>>, vector<8x8x128xf32>,
    return
  }
  func.func @transform_0(%arg0: i32) -> (i32, i32) {
    %c0_i32 = arith.constant 0 : i32
    %c0_i32_0 = arith.constant 0 : i32
    return %arg0, %c0_i32 : i32, i32
  }
  func.func @transform_1(%arg0: i32) -> (i32, i32) {
    %c0_i32 = arith.constant 0 : i32
    %c0_i32_0 = arith.constant 0 : i32
    %c0_i32_1 = arith.constant 0 : i32
    return %c0_i32, %c0_i32_0 : i32, i32
  }
  func.func @transform_2(%arg0: i32) -> (i32, i32) {
    %c0_i32 = arith.constant 0 : i32
    %c0_i32_0 = arith.constant 0 : i32
    %c0_i32_1 = arith.constant 0 : i32
    return %c0_i32, %c0_i32_0 : i32, i32
  }
  func.func @transform_3(%arg0: i32) -> (i32, i32, i32) {
    %c0_i32 = arith.constant 0 : i32
    %c0_i32_0 = arith.constant 0 : i32
    %c0_i32_1 = arith.constant 0 : i32
    return %arg0, %c0_i32, %c0_i32_0 : i32, i32, i32
  }
}

</mosaic_0001>

<llo_original>
// kernel: disentangled_self_attention.1
$region0: #{disentangled_self_attention.1}
  #allocation0 [shape = 'u32[]', space=smem, size = 0x4, offset = 0x4, fixed_abs, tag = 'smem constant byte address 0x4 - core index']
  #allocation1 [shape = 'u32[72,128]{1,0:T(1,128)}', space=vmem, size = 0x9000, scoped, tag = 'internal scratch']
  %s0 = inlined_call_operand.vmem [shape: bf16[64,48], index: 0, kind: input, shape index: {}]
  %s1 = inlined_call_operand.vmem [shape: bf16[48,384], index: 1, kind: input, shape index: {}]
  %s2 = inlined_call_operand.vmem [shape: f32[1,384], index: 2, kind: input, shape index: {}]
  %s3 = inlined_call_operand.hbm [shape: f32[8,8,128], index: 3, kind: output, shape index: {}]
  %s4 = sld [smem:[#allocation0]]
  $region22: #{disentangled_self_attention.1} parent=0
    _
  %s6 = ssub.s32 1, %s4
  %s7 = scalar_select 0, %s6, %s4
  $region1: #{disentangled_self_attention.1} parent=0
    #allocation2 [shape = 'u8[32768]{0}', space=vmem, size = 0x8000, scoped, tag = 'output window, operand 0, single buffered']
    #allocation3 [shape = 's32[1]{0}', space=sflag, size = 0x4, scoped, tag = 'scoped memory for disentangled_self_attention.1']
    %8 = vsyncpa [#allocation3], 0
    // Predicated region
    $region2: #{disentangled_self_attention.1} parent=1 // pred_check
      _
    $region3: #{disentangled_self_attention.1} parent=1 // pred_check_branch
      %10 = sbr.rel (0) target = $region5
    $region4: #{disentangled_self_attention.1} parent=1 // pred_region
      _
    $region5: #{disentangled_self_attention.1} parent=1 // pred_fallthru
      _
    // Predicated region
    $region6: #{disentangled_self_attention.1} parent=1 // pred_check
      _
    $region7: #{disentangled_self_attention.1} parent=1 // pred_check_branch
      %12 = sbr.rel (0) target = $region9
    $region8: #{disentangled_self_attention.1} parent=1 // pred_region
      _
    $region9: #{disentangled_self_attention.1} parent=1 // pred_fallthru
      _
    // Predicated region
    $region10: #{disentangled_self_attention.1} parent=1 // pred_check
      _
    $region11: #{disentangled_self_attention.1} parent=1 // pred_check_branch
      %14 = sbr.rel (0) target = $region13
    $region12: #{disentangled_self_attention.1} parent=1 // pred_region
      _
    $region13: #{disentangled_self_attention.1} parent=1 // pred_fallthru
      _
    %v16 = vld [vmem:[%s0] sm:$0xf]
    %v17 = vld [vmem:[%s0 + $0x4] sm:$0xf]
    %v18 = vld [vmem:[%s0 + $0x8] sm:$0xf]
    %v19 = vld [vmem:[%s0 + $0xc] sm:$0xf]
    %v20 = vld [vmem:[%s0 + $0x10] sm:$0xf]
    %v21 = vld [vmem:[%s0 + $0x14] sm:$0xf]
    %v22 = vld [vmem:[%s0 + $0x18] sm:$0xf]
    %v23 = vld [vmem:[%s0 + $0x1c] sm:$0xf]
    %v24 = vld [vmem:[%s1] sm:$0xff]
    %v25 = vld [vmem:[%s1 + $0x8] sm:$0xf]
    %v26 = vld [vmem:[%s1 + $0xc] sm:$0xff]
    %v27 = vld [vmem:[%s1 + $0x14] sm:$0xf]
    %v28 = vld [vmem:[%s1 + $0x18] sm:$0xff]
    %v29 = vld [vmem:[%s1 + $0x20] sm:$0xf]
    %v30 = vld [vmem:[%s1 + $0x24] sm:$0xff]
    %v31 = vld [vmem:[%s1 + $0x2c] sm:$0xf]
    %v32 = vld [vmem:[%s1 + $0x30] sm:$0xff]
    %v33 = vld [vmem:[%s1 + $0x38] sm:$0xf]
    %v34 = vld [vmem:[%s1 + $0x3c] sm:$0xff]
    %v35 = vld [vmem:[%s1 + $0x44] sm:$0xf]
    %v36 = vld [vmem:[%s2] sm:$0x7]
    %v38 = vperm.slane %v36, 0
    %v39 = vperm.slane %v36, 1
    %v40 = vperm.slane %v36, 2
    %v52 = vunpack.c.l.b16 %v16
    %v53 = vunpack.c.l.b16 %v17
    %v54 = vunpack.c.l.b16 %v18
    %v55 = vunpack.c.l.b16 %v19
    %v56 = vunpack.c.l.b16 %v20
    %v57 = vunpack.c.l.b16 %v21
    %v58 = vunpack.c.l.b16 %v22
    %v59 = vunpack.c.l.b16 %v23
    %v60 = vpack.c.b16 %v53, %v52
    %v61 = vpack.c.b16 %v55, %v54
    %v62 = vpack.c.b16 %v57, %v56
    %v63 = vpack.c.b16 %v59, %v58
    %v76 = vunpack.c.l.b16 %v24
    %v77 = vunpack.c.h.b16 %v24
    %v78 = vunpack.c.l.b16 %v25
    %v79 = vunpack.c.l.b16 %v26
    %v80 = vunpack.c.h.b16 %v26
    %v81 = vunpack.c.l.b16 %v27
    %v82 = vunpack.c.l.b16 %v28
    %v83 = vunpack.c.h.b16 %v28
    %v84 = vunpack.c.l.b16 %v29
    %v85 = vunpack.c.l.b16 %v30
    %v86 = vunpack.c.h.b16 %v30
    %v87 = vunpack.c.l.b16 %v31
    %v88 = vunpack.c.l.b16 %v32
    %v89 = vunpack.c.h.b16 %v32
    %v90 = vunpack.c.l.b16 %v33
    %v91 = vunpack.c.l.b16 %v34
    %v92 = vunpack.c.h.b16 %v34
    %v93 = vunpack.c.l.b16 %v35
    %v94 = vpack.c.b16 %v79, %v76
    %v95 = vpack.c.b16 %v80, %v77
    %v96 = vpack.c.b16 %v81, %v78
    %v97 = vpack.c.b16 %v85, %v82
    %v98 = vpack.c.b16 %v86, %v83
    %v99 = vpack.c.b16 %v87, %v84
    %v100 = vpack.c.b16 %v91, %v88
    %v101 = vpack.c.b16 %v92, %v89
    %v102 = vpack.c.b16 %v93, %v90
    %vm112 = vcmask 392192
    %v114 = vsel %vm112, %v60, 0
    %v117 = vsel %vm112, %v61, 0
    %v120 = vsel %vm112, %v62, 0
    %v123 = vsel %vm112, %v63, 0
    %125 = vmatpush.bf16.msra.mxu0 0
    %126 = vmatpush.bf16.msra.mxu0 0
    %127 = vmatpush.bf16.msra.mxu0 0
    %128 = vmatpush.bf16.msra.mxu0 0
    %129 = vmatpush.bf16.msra.mxu0 0
    %130 = vmatpush.bf16.msra.mxu0 %v100
    %131 = vmatpush.bf16.msra.mxu0 %v97
    %132 = vmatpush.bf16.msra.mxu0 %v94
    %133 = vmatmul.bf16.gmra.mxu0 %v114
    %v134 = vpop.f32.mrf.mxu0
    %v135 = vadd.f32 %v38, %v134
    %v136 = vpop.f32.mrf.mxu0
    %v137 = vadd.f32 %v38, %v136
    %138 = vmatmul.bf16.gmra.mxu0 %v117
    %v139 = vpop.f32.mrf.mxu0
    %v140 = vadd.f32 %v38, %v139
    %v141 = vpop.f32.mrf.mxu0
    %v142 = vadd.f32 %v38, %v141
    %143 = vmatmul.bf16.gmra.mxu0 %v120
    %v144 = vpop.f32.mrf.mxu0
    %v145 = vadd.f32 %v38, %v144
    %v146 = vpop.f32.mrf.mxu0
    %v147 = vadd.f32 %v38, %v146
    %148 = vmatmul.bf16.gmra.mxu0 %v123
    %v149 = vpop.f32.mrf.mxu0
    %v150 = vadd.f32 %v38, %v149
    %v151 = vpop.f32.mrf.mxu0
    %v152 = vadd.f32 %v38, %v151
    %153 = vdwg.mxu0
    %154 = vmatpush.bf16.msra.mxu0 0
    %155 = vmatpush.bf16.msra.mxu0 0
    %156 = vmatpush.bf16.msra.mxu0 0
    %157 = vmatpush.bf16.msra.mxu0 0
    %158 = vmatpush.bf16.msra.mxu0 0
    %159 = vmatpush.bf16.msra.mxu0 %v101
    %160 = vmatpush.bf16.msra.mxu0 %v98
    %161 = vmatpush.bf16.msra.mxu0 %v95
    %162 = vmatmul.bf16.gmra.mxu0 %v114
    %v163 = vpop.f32.mrf.mxu0
    %v164 = vadd.f32 %v39, %v163
    %v165 = vpop.f32.mrf.mxu0
    %v166 = vadd.f32 %v39, %v165
    %167 = vmatmul.bf16.gmra.mxu0 %v117
    %v168 = vpop.f32.mrf.mxu0
    %v169 = vadd.f32 %v39, %v168
    %v170 = vpop.f32.mrf.mxu0
    %v171 = vadd.f32 %v39, %v170
    %172 = vmatmul.bf16.gmra.mxu0 %v120
    %v173 = vpop.f32.mrf.mxu0
    %v174 = vadd.f32 %v39, %v173
    %v175 = vpop.f32.mrf.mxu0
    %v176 = vadd.f32 %v39, %v175
    %177 = vmatmul.bf16.gmra.mxu0 %v123
    %v178 = vpop.f32.mrf.mxu0
    %v179 = vadd.f32 %v39, %v178
    %v180 = vpop.f32.mrf.mxu0
    %v181 = vadd.f32 %v39, %v180
    %182 = vdwg.mxu0
    %183 = vmatpush.bf16.msra.mxu0 0
    %184 = vmatpush.bf16.msra.mxu0 0
    %185 = vmatpush.bf16.msra.mxu0 0
    %186 = vmatpush.bf16.msra.mxu0 0
    %187 = vmatpush.bf16.msra.mxu0 0
    %188 = vmatpush.bf16.msra.mxu0 %v102
    %189 = vmatpush.bf16.msra.mxu0 %v99
    %190 = vmatpush.bf16.msra.mxu0 %v96
    %191 = vmatmul.bf16.gmra.mxu0 %v114
    %v192 = vpop.f32.mrf.mxu0
    %v193 = vadd.f32 %v40, %v192
    %v194 = vpop.f32.mrf.mxu0
    %v195 = vadd.f32 %v40, %v194
    %196 = vmatmul.bf16.gmra.mxu0 %v117
    %v197 = vpop.f32.mrf.mxu0
    %v198 = vadd.f32 %v40, %v197
    %v199 = vpop.f32.mrf.mxu0
    %v200 = vadd.f32 %v40, %v199
    %201 = vmatmul.bf16.gmra.mxu0 %v120
    %v202 = vpop.f32.mrf.mxu0
    %v203 = vadd.f32 %v40, %v202
    %v204 = vpop.f32.mrf.mxu0
    %v205 = vadd.f32 %v40, %v204
    %206 = vmatmul.bf16.gmra.mxu0 %v123
    %v207 = vpop.f32.mrf.mxu0
    %v208 = vadd.f32 %v40, %v207
    %v209 = vpop.f32.mrf.mxu0
    %v210 = vadd.f32 %v40, %v209
    %211 = vdwg.mxu0
    %vm212 = vcmask 15360
    %v213 = vsel %vm212, %v193, -inf
    %v214 = vrot.slane %v213, 4
    %v215 = vmax.f32 %v213, %v214
    %v216 = vrot.slane %v215, 2
    %v217 = vmax.f32 %v215, %v216
    %v218 = vrot.slane %v217, 1
    %v219 = vmax.f32 %v217, %v218
    %v220 = vsel %vm212, %v195, -inf
    %v221 = vrot.slane %v220, 4
    %v222 = vmax.f32 %v220, %v221
    %v223 = vrot.slane %v222, 2
    %v224 = vmax.f32 %v222, %v223
    %v225 = vrot.slane %v224, 1
    %v226 = vmax.f32 %v224, %v225
    %v227 = vsel %vm212, %v198, -inf
    %v228 = vrot.slane %v227, 4
    %v229 = vmax.f32 %v227, %v228
    %v230 = vrot.slane %v229, 2
    %v231 = vmax.f32 %v229, %v230
    %v232 = vrot.slane %v231, 1
    %v233 = vmax.f32 %v231, %v232
    %v234 = vsel %vm212, %v200, -inf
    %v235 = vrot.slane %v234, 4
    %v236 = vmax.f32 %v234, %v235
    %v237 = vrot.slane %v236, 2
    %v238 = vmax.f32 %v236, %v237
    %v239 = vrot.slane %v238, 1
    %v240 = vmax.f32 %v238, %v239
    %v241 = vsel %vm212, %v203, -inf
    %v242 = vrot.slane %v241, 4
    %v243 = vmax.f32 %v241, %v242
    %v244 = vrot.slane %v243, 2
    %v245 = vmax.f32 %v243, %v244
    %v246 = vrot.slane %v245, 1
    %v247 = vmax.f32 %v245, %v246
    %v248 = vsel %vm212, %v205, -inf
    %v249 = vrot.slane %v248, 4
    %v250 = vmax.f32 %v248, %v249
    %v251 = vrot.slane %v250, 2
    %v252 = vmax.f32 %v250, %v251
    %v253 = vrot.slane %v252, 1
    %v254 = vmax.f32 %v252, %v253
    %v255 = vsel %vm212, %v208, -inf
    %v256 = vrot.slane %v255, 4
    %v257 = vmax.f32 %v255, %v256
    %v258 = vrot.slane %v257, 2
    %v259 = vmax.f32 %v257, %v258
    %v260 = vrot.slane %v259, 1
    %v261 = vmax.f32 %v259, %v260
    %v262 = vsel %vm212, %v210, -inf
    %v263 = vrot.slane %v262, 4
    %v264 = vmax.f32 %v262, %v263
    %v265 = vrot.slane %v264, 2
    %v266 = vmax.f32 %v264, %v265
    %v267 = vrot.slane %v266, 1
    %v268 = vmax.f32 %v266, %v267
    %v269 = vsub.f32 %v193, %v219
    %v270 = vsub.f32 %v195, %v226
    %v271 = vsub.f32 %v198, %v233
    %v272 = vsub.f32 %v200, %v240
    %v273 = vsub.f32 %v203, %v247
    %v274 = vsub.f32 %v205, %v254
    %v275 = vsub.f32 %v208, %v261
    %v276 = vsub.f32 %v210, %v268
    %v277 = vmul.f32 %v269, 1.442695
    %v278 = vpow.pop %v277
    %v279 = vmul.f32 %v270, 1.442695
    %v280 = vpow.pop %v279
    %v281 = vmul.f32 %v271, 1.442695
    %v282 = vpow.pop %v281
    %v283 = vmul.f32 %v272, 1.442695
    %v284 = vpow.pop %v283
    %v285 = vmul.f32 %v273, 1.442695
    %v286 = vpow.pop %v285
    %v287 = vmul.f32 %v274, 1.442695
    %v288 = vpow.pop %v287
    %v289 = vmul.f32 %v275, 1.442695
    %v290 = vpow.pop %v289
    %v291 = vmul.f32 %v276, 1.442695
    %v292 = vpow.pop %v291
    %v293 = vsel %vm212, %v278, 0.0
    %v294 = vrot.slane %v293, 4
    %v295 = vadd.f32 %v293, %v294
    %v296 = vrot.slane %v295, 2
    %v297 = vadd.f32 %v295, %v296
    %v298 = vrot.slane %v297, 1
    %v299 = vadd.f32 %v297, %v298
    %v300 = vsel %vm212, %v280, 0.0
    %v301 = vrot.slane %v300, 4
    %v302 = vadd.f32 %v300, %v301
    %v303 = vrot.slane %v302, 2
    %v304 = vadd.f32 %v302, %v303
    %v305 = vrot.slane %v304, 1
    %v306 = vadd.f32 %v304, %v305
    %v307 = vsel %vm212, %v282, 0.0
    %v308 = vrot.slane %v307, 4
    %v309 = vadd.f32 %v307, %v308
    %v310 = vrot.slane %v309, 2
    %v311 = vadd.f32 %v309, %v310
    %v312 = vrot.slane %v311, 1
    %v313 = vadd.f32 %v311, %v312
    %v314 = vsel %vm212, %v284, 0.0
    %v315 = vrot.slane %v314, 4
    %v316 = vadd.f32 %v314, %v315
    %v317 = vrot.slane %v316, 2
    %v318 = vadd.f32 %v316, %v317
    %v319 = vrot.slane %v318, 1
    %v320 = vadd.f32 %v318, %v319
    %v321 = vsel %vm212, %v286, 0.0
    %v322 = vrot.slane %v321, 4
    %v323 = vadd.f32 %v321, %v322
    %v324 = vrot.slane %v323, 2
    %v325 = vadd.f32 %v323, %v324
    %v326 = vrot.slane %v325, 1
    %v327 = vadd.f32 %v325, %v326
    %v328 = vsel %vm212, %v288, 0.0
    %v329 = vrot.slane %v328, 4
    %v330 = vadd.f32 %v328, %v329
    %v331 = vrot.slane %v330, 2
    %v332 = vadd.f32 %v330, %v331
    %v333 = vrot.slane %v332, 1
    %v334 = vadd.f32 %v332, %v333
    %v335 = vsel %vm212, %v290, 0.0
    %v336 = vrot.slane %v335, 4
    %v337 = vadd.f32 %v335, %v336
    %v338 = vrot.slane %v337, 2
    %v339 = vadd.f32 %v337, %v338
    %v340 = vrot.slane %v339, 1
    %v341 = vadd.f32 %v339, %v340
    %v342 = vsel %vm212, %v292, 0.0
    %v343 = vrot.slane %v342, 4
    %v344 = vadd.f32 %v342, %v343
    %v345 = vrot.slane %v344, 2
    %v346 = vadd.f32 %v344, %v345
    %v347 = vrot.slane %v346, 1
    %v348 = vadd.f32 %v346, %v347
    %v349 = vrcp.pop %v299
    %v350 = vrcp.pop %v306
    %v351 = vrcp.pop %v313
    %v352 = vrcp.pop %v320
    %v353 = vrcp.pop %v327
    %v354 = vrcp.pop %v334
    %v355 = vrcp.pop %v341
    %v356 = vrcp.pop %v348
    %v357 = vmul.f32 %v278, %v349
    %v358 = vmul.f32 %v280, %v350
    %v359 = vmul.f32 %v282, %v351
    %v360 = vmul.f32 %v284, %v352
    %v361 = vmul.f32 %v286, %v353
    %v362 = vmul.f32 %v288, %v354
    %v363 = vmul.f32 %v290, %v355
    %v364 = vmul.f32 %v292, %v356
    %vm365 = vcmask 1048064
    %v366 = vsel %vm365, %v135, 0.0
    %v367 = vrot.slane %v366, 4
    %v368 = vadd.f32 %v366, %v367
    %v369 = vrot.slane %v368, 2
    %v370 = vadd.f32 %v368, %v369
    %v371 = vrot.slane %v370, 1
    %v372 = vadd.f32 %v370, %v371
    %v373 = vsel %vm365, %v137, 0.0
    %v374 = vrot.slane %v373, 4
    %v375 = vadd.f32 %v373, %v374
    %v376 = vrot.slane %v375, 2
    %v377 = vadd.f32 %v375, %v376
    %v378 = vrot.slane %v377, 1
    %v379 = vadd.f32 %v377, %v378
    %v380 = vsel %vm365, %v140, 0.0
    %v381 = vrot.slane %v380, 4
    %v382 = vadd.f32 %v380, %v381
    %v383 = vrot.slane %v382, 2
    %v384 = vadd.f32 %v382, %v383
    %v385 = vrot.slane %v384, 1
    %v386 = vadd.f32 %v384, %v385
    %v387 = vsel %vm365, %v142, 0.0
    %v388 = vrot.slane %v387, 4
    %v389 = vadd.f32 %v387, %v388
    %v390 = vrot.slane %v389, 2
    %v391 = vadd.f32 %v389, %v390
    %v392 = vrot.slane %v391, 1
    %v393 = vadd.f32 %v391, %v392
    %v394 = vsel %vm365, %v145, 0.0
    %v395 = vrot.slane %v394, 4
    %v396 = vadd.f32 %v394, %v395
    %v397 = vrot.slane %v396, 2
    %v398 = vadd.f32 %v396, %v397
    %v399 = vrot.slane %v398, 1
    %v400 = vadd.f32 %v398, %v399
    %v401 = vsel %vm365, %v147, 0.0
    %v402 = vrot.slane %v401, 4
    %v403 = vadd.f32 %v401, %v402
    %v404 = vrot.slane %v403, 2
    %v405 = vadd.f32 %v403, %v404
    %v406 = vrot.slane %v405, 1
    %v407 = vadd.f32 %v405, %v406
    %v408 = vsel %vm365, %v150, 0.0
    %v409 = vrot.slane %v408, 4
    %v410 = vadd.f32 %v408, %v409
    %v411 = vrot.slane %v410, 2
    %v412 = vadd.f32 %v410, %v411
    %v413 = vrot.slane %v412, 1
    %v414 = vadd.f32 %v412, %v413
    %v415 = vsel %vm365, %v152, 0.0
    %v416 = vrot.slane %v415, 4
    %v417 = vadd.f32 %v415, %v416
    %v418 = vrot.slane %v417, 2
    %v419 = vadd.f32 %v417, %v418
    %v420 = vrot.slane %v419, 1
    %v421 = vadd.f32 %v419, %v420
    %v422 = vrcp.pop 8.0
    %v423 = vmul.f32 8.0, %v422
    %v424 = vsub.f32 1.0, %v423
    %v425 = vmul.f32 %v422, %v424
    %v426 = vadd.f32 %v422, %v425
    %vm427 = vweird.f32 %v422
    %v428 = vsel %vm427, %v422, %v426
    %v429 = vmul.f32 %v372, %v428
    %v430 = vmul.f32 %v379, %v428
    %v431 = vmul.f32 %v386, %v428
    %v432 = vmul.f32 %v393, %v428
    %v433 = vmul.f32 %v400, %v428
    %v434 = vmul.f32 %v407, %v428
    %v435 = vmul.f32 %v414, %v428
    %v436 = vmul.f32 %v421, %v428
    %v437 = vsub.f32 %v135, %v429
    %v438 = vsub.f32 %v137, %v430
    %v439 = vsub.f32 %v140, %v431
    %v440 = vsub.f32 %v142, %v432
    %v441 = vsub.f32 %v145, %v433
    %v442 = vsub.f32 %v147, %v434
    %v443 = vsub.f32 %v150, %v435
    %v444 = vsub.f32 %v152, %v436
    %vm445 = vcmask 523264
    %v446 = vsel %vm445, %v164, 0.0
    %v447 = vrot.slane %v446, 4
    %v448 = vadd.f32 %v446, %v447
    %v449 = vrot.slane %v448, 2
    %v450 = vadd.f32 %v448, %v449
    %v451 = vrot.slane %v450, 1
    %v452 = vadd.f32 %v450, %v451
    %v453 = vsel %vm445, %v166, 0.0
    %v454 = vrot.slane %v453, 4
    %v455 = vadd.f32 %v453, %v454
    %v456 = vrot.slane %v455, 2
    %v457 = vadd.f32 %v455, %v456
    %v458 = vrot.slane %v457, 1
    %v459 = vadd.f32 %v457, %v458
    %v460 = vsel %vm445, %v169, 0.0
    %v461 = vrot.slane %v460, 4
    %v462 = vadd.f32 %v460, %v461
    %v463 = vrot.slane %v462, 2
    %v464 = vadd.f32 %v462, %v463
    %v465 = vrot.slane %v464, 1
    %v466 = vadd.f32 %v464, %v465
    %v467 = vsel %vm445, %v171, 0.0
    %v468 = vrot.slane %v467, 4
    %v469 = vadd.f32 %v467, %v468
    %v470 = vrot.slane %v469, 2
    %v471 = vadd.f32 %v469, %v470
    %v472 = vrot.slane %v471, 1
    %v473 = vadd.f32 %v471, %v472
    %v474 = vsel %vm445, %v174, 0.0
    %v475 = vrot.slane %v474, 4
    %v476 = vadd.f32 %v474, %v475
    %v477 = vrot.slane %v476, 2
    %v478 = vadd.f32 %v476, %v477
    %v479 = vrot.slane %v478, 1
    %v480 = vadd.f32 %v478, %v479
    %v481 = vsel %vm445, %v176, 0.0
    %v482 = vrot.slane %v481, 4
    %v483 = vadd.f32 %v481, %v482
    %v484 = vrot.slane %v483, 2
    %v485 = vadd.f32 %v483, %v484
    %v486 = vrot.slane %v485, 1
    %v487 = vadd.f32 %v485, %v486
    %v488 = vsel %vm445, %v179, 0.0
    %v489 = vrot.slane %v488, 4
    %v490 = vadd.f32 %v488, %v489
    %v491 = vrot.slane %v490, 2
    %v492 = vadd.f32 %v490, %v491
    %v493 = vrot.slane %v492, 1
    %v494 = vadd.f32 %v492, %v493
    %v495 = vsel %vm445, %v181, 0.0
    %v496 = vrot.slane %v495, 4
    %v497 = vadd.f32 %v495, %v496
    %v498 = vrot.slane %v497, 2
    %v499 = vadd.f32 %v497, %v498
    %v500 = vrot.slane %v499, 1
    %v501 = vadd.f32 %v499, %v500
    %v502 = vmul.f32 %v452, %v428
    %v503 = vmul.f32 %v459, %v428
    %v504 = vmul.f32 %v466, %v428
    %v505 = vmul.f32 %v473, %v428
    %v506 = vmul.f32 %v480, %v428
    %v507 = vmul.f32 %v487, %v428
    %v508 = vmul.f32 %v494, %v428
    %v509 = vmul.f32 %v501, %v428
    %v510 = vsub.f32 %v164, %v502
    %v511 = vsub.f32 %v166, %v503
    %v512 = vsub.f32 %v169, %v504
    %v513 = vsub.f32 %v171, %v505
    %v514 = vsub.f32 %v174, %v506
    %v515 = vsub.f32 %v176, %v507
    %v516 = vsub.f32 %v179, %v508
    %v517 = vsub.f32 %v181, %v509
    %526 = vrot.lane.b32.xlu0 %v437, 96
    %v527 = vpop.permute.xlu0 %526
    %528 = vrot.lane.b32.xlu0 %v438, 96
    %v529 = vpop.permute.xlu0 %528
    %530 = vrot.lane.b32.xlu0 %v439, 96
    %v531 = vpop.permute.xlu0 %530
    %532 = vrot.lane.b32.xlu0 %v440, 96
    %v533 = vpop.permute.xlu0 %532
    %534 = vrot.lane.b32.xlu0 %v441, 96
    %v535 = vpop.permute.xlu0 %534
    %536 = vrot.lane.b32.xlu0 %v442, 96
    %v537 = vpop.permute.xlu0 %536
    %538 = vrot.lane.b32.xlu0 %v443, 96
    %v539 = vpop.permute.xlu0 %538
    %540 = vrot.lane.b32.xlu0 %v444, 96
    %v541 = vpop.permute.xlu0 %540
    %550 = vrot.lane.b32.xlu0 %v510, 96
    %v551 = vpop.permute.xlu0 %550
    %552 = vrot.lane.b32.xlu0 %v511, 96
    %v553 = vpop.permute.xlu0 %552
    %554 = vrot.lane.b32.xlu0 %v512, 96
    %v555 = vpop.permute.xlu0 %554
    %556 = vrot.lane.b32.xlu0 %v513, 96
    %v557 = vpop.permute.xlu0 %556
    %558 = vrot.lane.b32.xlu0 %v514, 96
    %v559 = vpop.permute.xlu0 %558
    %560 = vrot.lane.b32.xlu0 %v515, 96
    %v561 = vpop.permute.xlu0 %560
    %562 = vrot.lane.b32.xlu0 %v516, 96
    %v563 = vpop.permute.xlu0 %562
    %564 = vrot.lane.b32.xlu0 %v517, 96
    %v565 = vpop.permute.xlu0 %564
    %574 = vrot.lane.b32.xlu0 %v164, 96
    %v575 = vpop.permute.xlu0 %574
    %576 = vrot.lane.b32.xlu0 %v166, 96
    %v577 = vpop.permute.xlu0 %576
    %578 = vrot.lane.b32.xlu0 %v169, 96
    %v579 = vpop.permute.xlu0 %578
    %580 = vrot.lane.b32.xlu0 %v171, 96
    %v581 = vpop.permute.xlu0 %580
    %582 = vrot.lane.b32.xlu0 %v174, 96
    %v583 = vpop.permute.xlu0 %582
    %584 = vrot.lane.b32.xlu0 %v176, 96
    %v585 = vpop.permute.xlu0 %584
    %586 = vrot.lane.b32.xlu0 %v179, 96
    %v587 = vpop.permute.xlu0 %586
    %588 = vrot.lane.b32.xlu0 %v181, 96
    %v589 = vpop.permute.xlu0 %588
    %598 = vset.pattern.permute.xlu0 0
    %599 = vperm.xlu0 %598, %v357
    %v600 = vpop.permute.xlu0 %599
    %601 = vset.pattern.permute.xlu0 0
    %602 = vperm.xlu0 %601, %v358
    %v603 = vpop.permute.xlu0 %602
    %604 = vset.pattern.permute.xlu0 0
    %605 = vperm.xlu0 %604, %v359
    %v606 = vpop.permute.xlu0 %605
    %607 = vset.pattern.permute.xlu0 0
    %608 = vperm.xlu0 %607, %v360
    %v609 = vpop.permute.xlu0 %608
    %610 = vset.pattern.permute.xlu0 0
    %611 = vperm.xlu0 %610, %v361
    %v612 = vpop.permute.xlu0 %611
    %613 = vset.pattern.permute.xlu0 0
    %614 = vperm.xlu0 %613, %v362
    %v615 = vpop.permute.xlu0 %614
    %616 = vset.pattern.permute.xlu0 0
    %617 = vperm.xlu0 %616, %v363
    %v618 = vpop.permute.xlu0 %617
    %619 = vset.pattern.permute.xlu0 0
    %620 = vperm.xlu0 %619, %v364
    %v621 = vpop.permute.xlu0 %620
    %v622 = vlaneseq
    %v623 = vand.u32 %v622, 127
    %v624 = vperm.slane %v600, %v623
    %v625 = vperm.slane %v603, %v623
    %v626 = vperm.slane %v606, %v623
    %v627 = vperm.slane %v609, %v623
    %v628 = vperm.slane %v612, %v623
    %v629 = vperm.slane %v615, %v623
    %v630 = vperm.slane %v618, %v623
    %v631 = vperm.slane %v621, %v623
    %vm632 = vcmask 1041409
    %v633 = vsel %vm632, %v625, %v624
    %vm634 = vcmask 1042434
    %v635 = vsel %vm634, %v626, %v633
    %vm636 = vcmask 1043459
    %v637 = vsel %vm636, %v627, %v635
    %vm638 = vcmask 1044484
    %v639 = vsel %vm638, %v628, %v637
    %vm640 = vcmask 1045509
    %v641 = vsel %vm640, %v629, %v639
    %vm642 = vcmask 1046534
    %v643 = vsel %vm642, %v630, %v641
    %vm644 = vcmask 1047559
    %v645 = vsel %vm644, %v631, %v643
    %646 = vset.pattern.permute.xlu0 1
    %647 = vperm.xlu0 %646, %v357
    %v648 = vpop.permute.xlu0 %647
    %649 = vset.pattern.permute.xlu0 1
    %650 = vperm.xlu0 %649, %v358
    %v651 = vpop.permute.xlu0 %650
    %652 = vset.pattern.permute.xlu0 1
    %653 = vperm.xlu0 %652, %v359
    %v654 = vpop.permute.xlu0 %653
    %655 = vset.pattern.permute.xlu0 1
    %656 = vperm.xlu0 %655, %v360
    %v657 = vpop.permute.xlu0 %656
    %658 = vset.pattern.permute.xlu0 1
    %659 = vperm.xlu0 %658, %v361
    %v660 = vpop.permute.xlu0 %659
    %661 = vset.pattern.permute.xlu0 1
    %662 = vperm.xlu0 %661, %v362
    %v663 = vpop.permute.xlu0 %662
    %664 = vset.pattern.permute.xlu0 1
    %665 = vperm.xlu0 %664, %v363
    %v666 = vpop.permute.xlu0 %665
    %667 = vset.pattern.permute.xlu0 1
    %668 = vperm.xlu0 %667, %v364
    %v669 = vpop.permute.xlu0 %668
    %v670 = vperm.slane %v648, %v623
    %v671 = vperm.slane %v651, %v623
    %v672 = vperm.slane %v654, %v623
    %v673 = vperm.slane %v657, %v623
    %v674 = vperm.slane %v660, %v623
    %v675 = vperm.slane %v663, %v623
    %v676 = vperm.slane %v666, %v623
    %v677 = vperm.slane %v669, %v623
    %v678 = vsel %vm632, %v671, %v670
    %v679 = vsel %vm634, %v672, %v678
    %v680 = vsel %vm636, %v673, %v679
    %v681 = vsel %vm638, %v674, %v680
    %v682 = vsel %vm640, %v675, %v681
    %v683 = vsel %vm642, %v676, %v682
    %v684 = vsel %vm644, %v677, %v683
    %685 = vrot.lane.b32.xlu0 %v437, 64
    %v686 = vpop.permute.xlu0 %685
    %vm687 = vcmask 261120
    %v688 = vsel %vm687, %v686, 0
    %v690 = vsel %vm687, %v510, 0
    %692 = vmatpush.xpose.msra.mxu0 0.0
    %693 = vmatpush.xpose.msra.mxu0 0.0
    %694 = vmatpush.xpose.msra.mxu0 0.0
    %695 = vmatpush.xpose.msra.mxu0 0.0
    %696 = vmatpush.xpose.msra.mxu0 0.0
    %697 = vmatpush.xpose.msra.mxu0 0.0
    %698 = vmatpush.xpose.msra.mxu0 0.0
    %699 = vmatpush.xpose.msra.mxu0 0.0
    %700 = vmatpush.xpose.msra.mxu0 0.0
    %701 = vmatpush.xpose.msra.mxu0 0.0
    %702 = vmatpush.xpose.msra.mxu0 0.0
    %703 = vmatpush.xpose.msra.mxu0 0.0
    %704 = vmatpush.xpose.msra.mxu0 0.0
    %705 = vmatpush.xpose.msra.mxu0 0.0
    %706 = vmatpush.xpose.msra.mxu0 0.0
    %707 = vmatpush.xpose.msra.mxu0 %v690
    %708 = vmatmul.f32.gmra.mxu0 %v688
    %v709 = vpop.f32.mrf.mxu0
    %v710 = vadd.f32 0.0, %v709
    %711 = vdwg.mxu0
    %712 = vrot.lane.b32.xlu0 %v438, 64
    %v713 = vpop.permute.xlu0 %712
    %v714 = vsel %vm687, %v713, 0
    %v716 = vsel %vm687, %v511, 0
    %718 = vmatpush.xpose.msra.mxu0 0.0
    %719 = vmatpush.xpose.msra.mxu0 0.0
    %720 = vmatpush.xpose.msra.mxu0 0.0
    %721 = vmatpush.xpose.msra.mxu0 0.0
    %722 = vmatpush.xpose.msra.mxu0 0.0
    %723 = vmatpush.xpose.msra.mxu0 0.0
    %724 = vmatpush.xpose.msra.mxu0 0.0
    %725 = vmatpush.xpose.msra.mxu0 0.0
    %726 = vmatpush.xpose.msra.mxu0 0.0
    %727 = vmatpush.xpose.msra.mxu0 0.0
    %728 = vmatpush.xpose.msra.mxu0 0.0
    %729 = vmatpush.xpose.msra.mxu0 0.0
    %730 = vmatpush.xpose.msra.mxu0 0.0
    %731 = vmatpush.xpose.msra.mxu0 0.0
    %732 = vmatpush.xpose.msra.mxu0 0.0
    %733 = vmatpush.xpose.msra.mxu0 %v716
    %734 = vmatmul.f32.gmra.mxu0 %v714
    %v735 = vpop.f32.mrf.mxu0
    %v736 = vadd.f32 0.0, %v735
    %737 = vdwg.mxu0
    %738 = vrot.lane.b32.xlu0 %v439, 64
    %v739 = vpop.permute.xlu0 %738
    %v740 = vsel %vm687, %v739, 0
    %v742 = vsel %vm687, %v512, 0
    %744 = vmatpush.xpose.msra.mxu0 0.0
    %745 = vmatpush.xpose.msra.mxu0 0.0
    %746 = vmatpush.xpose.msra.mxu0 0.0
    %747 = vmatpush.xpose.msra.mxu0 0.0
    %748 = vmatpush.xpose.msra.mxu0 0.0
    %749 = vmatpush.xpose.msra.mxu0 0.0
    %750 = vmatpush.xpose.msra.mxu0 0.0
    %751 = vmatpush.xpose.msra.mxu0 0.0
    %752 = vmatpush.xpose.msra.mxu0 0.0
    %753 = vmatpush.xpose.msra.mxu0 0.0
    %754 = vmatpush.xpose.msra.mxu0 0.0
    %755 = vmatpush.xpose.msra.mxu0 0.0
    %756 = vmatpush.xpose.msra.mxu0 0.0
    %757 = vmatpush.xpose.msra.mxu0 0.0
    %758 = vmatpush.xpose.msra.mxu0 0.0
    %759 = vmatpush.xpose.msra.mxu0 %v742
    %760 = vmatmul.f32.gmra.mxu0 %v740
    %v761 = vpop.f32.mrf.mxu0
    %v762 = vadd.f32 0.0, %v761
    %763 = vdwg.mxu0
    %764 = vrot.lane.b32.xlu0 %v440, 64
    %v765 = vpop.permute.xlu0 %764
    %v766 = vsel %vm687, %v765, 0
    %v768 = vsel %vm687, %v513, 0
    %770 = vmatpush.xpose.msra.mxu0 0.0
    %771 = vmatpush.xpose.msra.mxu0 0.0
    %772 = vmatpush.xpose.msra.mxu0 0.0
    %773 = vmatpush.xpose.msra.mxu0 0.0
    %774 = vmatpush.xpose.msra.mxu0 0.0
    %775 = vmatpush.xpose.msra.mxu0 0.0
    %776 = vmatpush.xpose.msra.mxu0 0.0
    %777 = vmatpush.xpose.msra.mxu0 0.0
    %778 = vmatpush.xpose.msra.mxu0 0.0
    %779 = vmatpush.xpose.msra.mxu0 0.0
    %780 = vmatpush.xpose.msra.mxu0 0.0
    %781 = vmatpush.xpose.msra.mxu0 0.0
    %782 = vmatpush.xpose.msra.mxu0 0.0
    %783 = vmatpush.xpose.msra.mxu0 0.0
    %784 = vmatpush.xpose.msra.mxu0 0.0
    %785 = vmatpush.xpose.msra.mxu0 %v768
    %786 = vmatmul.f32.gmra.mxu0 %v766
    %v787 = vpop.f32.mrf.mxu0
    %v788 = vadd.f32 0.0, %v787
    %789 = vdwg.mxu0
    %790 = vrot.lane.b32.xlu0 %v441, 64
    %v791 = vpop.permute.xlu0 %790
    %v792 = vsel %vm687, %v791, 0
    %v794 = vsel %vm687, %v514, 0
    %796 = vmatpush.xpose.msra.mxu0 0.0
    %797 = vmatpush.xpose.msra.mxu0 0.0
    %798 = vmatpush.xpose.msra.mxu0 0.0
    %799 = vmatpush.xpose.msra.mxu0 0.0
    %800 = vmatpush.xpose.msra.mxu0 0.0
    %801 = vmatpush.xpose.msra.mxu0 0.0
    %802 = vmatpush.xpose.msra.mxu0 0.0
    %803 = vmatpush.xpose.msra.mxu0 0.0
    %804 = vmatpush.xpose.msra.mxu0 0.0
    %805 = vmatpush.xpose.msra.mxu0 0.0
    %806 = vmatpush.xpose.msra.mxu0 0.0
    %807 = vmatpush.xpose.msra.mxu0 0.0
    %808 = vmatpush.xpose.msra.mxu0 0.0
    %809 = vmatpush.xpose.msra.mxu0 0.0
    %810 = vmatpush.xpose.msra.mxu0 0.0
    %811 = vmatpush.xpose.msra.mxu0 %v794
    %812 = vmatmul.f32.gmra.mxu0 %v792
    %v813 = vpop.f32.mrf.mxu0
    %v814 = vadd.f32 0.0, %v813
    %815 = vdwg.mxu0
    %816 = vrot.lane.b32.xlu0 %v442, 64
    %v817 = vpop.permute.xlu0 %816
    %v818 = vsel %vm687, %v817, 0
    %v820 = vsel %vm687, %v515, 0
    %822 = vmatpush.xpose.msra.mxu0 0.0
    %823 = vmatpush.xpose.msra.mxu0 0.0
    %824 = vmatpush.xpose.msra.mxu0 0.0
    %825 = vmatpush.xpose.msra.mxu0 0.0
    %826 = vmatpush.xpose.msra.mxu0 0.0
    %827 = vmatpush.xpose.msra.mxu0 0.0
    %828 = vmatpush.xpose.msra.mxu0 0.0
    %829 = vmatpush.xpose.msra.mxu0 0.0
    %830 = vmatpush.xpose.msra.mxu0 0.0
    %831 = vmatpush.xpose.msra.mxu0 0.0
    %832 = vmatpush.xpose.msra.mxu0 0.0
    %833 = vmatpush.xpose.msra.mxu0 0.0
    %834 = vmatpush.xpose.msra.mxu0 0.0
    %835 = vmatpush.xpose.msra.mxu0 0.0
    %836 = vmatpush.xpose.msra.mxu0 0.0
    %837 = vmatpush.xpose.msra.mxu0 %v820
    %838 = vmatmul.f32.gmra.mxu0 %v818
    %v839 = vpop.f32.mrf.mxu0
    %v840 = vadd.f32 0.0, %v839
    %841 = vdwg.mxu0
    %842 = vrot.lane.b32.xlu0 %v443, 64
    %v843 = vpop.permute.xlu0 %842
    %v844 = vsel %vm687, %v843, 0
    %v846 = vsel %vm687, %v516, 0
    %848 = vmatpush.xpose.msra.mxu0 0.0
    %849 = vmatpush.xpose.msra.mxu0 0.0
    %850 = vmatpush.xpose.msra.mxu0 0.0
    %851 = vmatpush.xpose.msra.mxu0 0.0
    %852 = vmatpush.xpose.msra.mxu0 0.0
    %853 = vmatpush.xpose.msra.mxu0 0.0
    %854 = vmatpush.xpose.msra.mxu0 0.0
    %855 = vmatpush.xpose.msra.mxu0 0.0
    %856 = vmatpush.xpose.msra.mxu0 0.0
    %857 = vmatpush.xpose.msra.mxu0 0.0
    %858 = vmatpush.xpose.msra.mxu0 0.0
    %859 = vmatpush.xpose.msra.mxu0 0.0
    %860 = vmatpush.xpose.msra.mxu0 0.0
    %861 = vmatpush.xpose.msra.mxu0 0.0
    %862 = vmatpush.xpose.msra.mxu0 0.0
    %863 = vmatpush.xpose.msra.mxu0 %v846
    %864 = vmatmul.f32.gmra.mxu0 %v844
    %v865 = vpop.f32.mrf.mxu0
    %v866 = vadd.f32 0.0, %v865
    %867 = vdwg.mxu0
    %868 = vrot.lane.b32.xlu0 %v444, 64
    %v869 = vpop.permute.xlu0 %868
    %v870 = vsel %vm687, %v869, 0
    %v872 = vsel %vm687, %v517, 0
    %874 = vmatpush.xpose.msra.mxu0 0.0
    %875 = vmatpush.xpose.msra.mxu0 0.0
    %876 = vmatpush.xpose.msra.mxu0 0.0
    %877 = vmatpush.xpose.msra.mxu0 0.0
    %878 = vmatpush.xpose.msra.mxu0 0.0
    %879 = vmatpush.xpose.msra.mxu0 0.0
    %880 = vmatpush.xpose.msra.mxu0 0.0
    %881 = vmatpush.xpose.msra.mxu0 0.0
    %882 = vmatpush.xpose.msra.mxu0 0.0
    %883 = vmatpush.xpose.msra.mxu0 0.0
    %884 = vmatpush.xpose.msra.mxu0 0.0
    %885 = vmatpush.xpose.msra.mxu0 0.0
    %886 = vmatpush.xpose.msra.mxu0 0.0
    %887 = vmatpush.xpose.msra.mxu0 0.0
    %888 = vmatpush.xpose.msra.mxu0 0.0
    %889 = vmatpush.xpose.msra.mxu0 %v872
    %890 = vmatmul.f32.gmra.mxu0 %v870
    %v891 = vpop.f32.mrf.mxu0
    %v892 = vadd.f32 0.0, %v891
    %893 = vdwg.mxu0
    %894 = vrot.lane.b32.xlu0 %v527, 64
    %v895 = vpop.permute.xlu0 %894
    %v896 = vsel %vm687, %v895, 0
    %v898 = vsel %vm687, %v551, 0
    %900 = vmatpush.xpose.msra.mxu0 0.0
    %901 = vmatpush.xpose.msra.mxu0 0.0
    %902 = vmatpush.xpose.msra.mxu0 0.0
    %903 = vmatpush.xpose.msra.mxu0 0.0
    %904 = vmatpush.xpose.msra.mxu0 0.0
    %905 = vmatpush.xpose.msra.mxu0 0.0
    %906 = vmatpush.xpose.msra.mxu0 0.0
    %907 = vmatpush.xpose.msra.mxu0 0.0
    %908 = vmatpush.xpose.msra.mxu0 0.0
    %909 = vmatpush.xpose.msra.mxu0 0.0
    %910 = vmatpush.xpose.msra.mxu0 0.0
    %911 = vmatpush.xpose.msra.mxu0 0.0
    %912 = vmatpush.xpose.msra.mxu0 0.0
    %913 = vmatpush.xpose.msra.mxu0 0.0
    %914 = vmatpush.xpose.msra.mxu0 0.0
    %915 = vmatpush.xpose.msra.mxu0 %v898
    %916 = vmatmul.f32.gmra.mxu0 %v896
    %v917 = vpop.f32.mrf.mxu0
    %v918 = vadd.f32 0.0, %v917
    %919 = vdwg.mxu0
    %920 = vrot.lane.b32.xlu0 %v529, 64
    %v921 = vpop.permute.xlu0 %920
    %v922 = vsel %vm687, %v921, 0
    %v924 = vsel %vm687, %v553, 0
    %926 = vmatpush.xpose.msra.mxu0 0.0
    %927 = vmatpush.xpose.msra.mxu0 0.0
    %928 = vmatpush.xpose.msra.mxu0 0.0
    %929 = vmatpush.xpose.msra.mxu0 0.0
    %930 = vmatpush.xpose.msra.mxu0 0.0
    %931 = vmatpush.xpose.msra.mxu0 0.0
    %932 = vmatpush.xpose.msra.mxu0 0.0
    %933 = vmatpush.xpose.msra.mxu0 0.0
    %934 = vmatpush.xpose.msra.mxu0 0.0
    %935 = vmatpush.xpose.msra.mxu0 0.0
    %936 = vmatpush.xpose.msra.mxu0 0.0
    %937 = vmatpush.xpose.msra.mxu0 0.0
    %938 = vmatpush.xpose.msra.mxu0 0.0
    %939 = vmatpush.xpose.msra.mxu0 0.0
    %940 = vmatpush.xpose.msra.mxu0 0.0
    %941 = vmatpush.xpose.msra.mxu0 %v924
    %942 = vmatmul.f32.gmra.mxu0 %v922
    %v943 = vpop.f32.mrf.mxu0
    %v944 = vadd.f32 0.0, %v943
    %945 = vdwg.mxu0
    %946 = vrot.lane.b32.xlu0 %v531, 64
    %v947 = vpop.permute.xlu0 %946
    %v948 = vsel %vm687, %v947, 0
    %v950 = vsel %vm687, %v555, 0
    %952 = vmatpush.xpose.msra.mxu0 0.0
    %953 = vmatpush.xpose.msra.mxu0 0.0
    %954 = vmatpush.xpose.msra.mxu0 0.0
    %955 = vmatpush.xpose.msra.mxu0 0.0
    %956 = vmatpush.xpose.msra.mxu0 0.0
    %957 = vmatpush.xpose.msra.mxu0 0.0
    %958 = vmatpush.xpose.msra.mxu0 0.0
    %959 = vmatpush.xpose.msra.mxu0 0.0
    %960 = vmatpush.xpose.msra.mxu0 0.0
    %961 = vmatpush.xpose.msra.mxu0 0.0
    %962 = vmatpush.xpose.msra.mxu0 0.0
    %963 = vmatpush.xpose.msra.mxu0 0.0
    %964 = vmatpush.xpose.msra.mxu0 0.0
    %965 = vmatpush.xpose.msra.mxu0 0.0
    %966 = vmatpush.xpose.msra.mxu0 0.0
    %967 = vmatpush.xpose.msra.mxu0 %v950
    %968 = vmatmul.f32.gmra.mxu0 %v948
    %v969 = vpop.f32.mrf.mxu0
    %v970 = vadd.f32 0.0, %v969
    %971 = vdwg.mxu0
    %972 = vrot.lane.b32.xlu0 %v533, 64
    %v973 = vpop.permute.xlu0 %972
    %v974 = vsel %vm687, %v973, 0
    %v976 = vsel %vm687, %v557, 0
    %978 = vmatpush.xpose.msra.mxu0 0.0
    %979 = vmatpush.xpose.msra.mxu0 0.0
    %980 = vmatpush.xpose.msra.mxu0 0.0
    %981 = vmatpush.xpose.msra.mxu0 0.0
    %982 = vmatpush.xpose.msra.mxu0 0.0
    %983 = vmatpush.xpose.msra.mxu0 0.0
    %984 = vmatpush.xpose.msra.mxu0 0.0
    %985 = vmatpush.xpose.msra.mxu0 0.0
    %986 = vmatpush.xpose.msra.mxu0 0.0
    %987 = vmatpush.xpose.msra.mxu0 0.0
    %988 = vmatpush.xpose.msra.mxu0 0.0
    %989 = vmatpush.xpose.msra.mxu0 0.0
    %990 = vmatpush.xpose.msra.mxu0 0.0
    %991 = vmatpush.xpose.msra.mxu0 0.0
    %992 = vmatpush.xpose.msra.mxu0 0.0
    %993 = vmatpush.xpose.msra.mxu0 %v976
    %994 = vmatmul.f32.gmra.mxu0 %v974
    %v995 = vpop.f32.mrf.mxu0
    %v996 = vadd.f32 0.0, %v995
    %997 = vdwg.mxu0
    %998 = vrot.lane.b32.xlu0 %v535, 64
    %v999 = vpop.permute.xlu0 %998
    %v1000 = vsel %vm687, %v999, 0
    %v1002 = vsel %vm687, %v559, 0
    %1004 = vmatpush.xpose.msra.mxu0 0.0
    %1005 = vmatpush.xpose.msra.mxu0 0.0
    %1006 = vmatpush.xpose.msra.mxu0 0.0
    %1007 = vmatpush.xpose.msra.mxu0 0.0
    %1008 = vmatpush.xpose.msra.mxu0 0.0
    %1009 = vmatpush.xpose.msra.mxu0 0.0
    %1010 = vmatpush.xpose.msra.mxu0 0.0
    %1011 = vmatpush.xpose.msra.mxu0 0.0
    %1012 = vmatpush.xpose.msra.mxu0 0.0
    %1013 = vmatpush.xpose.msra.mxu0 0.0
    %1014 = vmatpush.xpose.msra.mxu0 0.0
    %1015 = vmatpush.xpose.msra.mxu0 0.0
    %1016 = vmatpush.xpose.msra.mxu0 0.0
    %1017 = vmatpush.xpose.msra.mxu0 0.0
    %1018 = vmatpush.xpose.msra.mxu0 0.0
    %1019 = vmatpush.xpose.msra.mxu0 %v1002
    %1020 = vmatmul.f32.gmra.mxu0 %v1000
    %v1021 = vpop.f32.mrf.mxu0
    %v1022 = vadd.f32 0.0, %v1021
    %1023 = vdwg.mxu0
    %1024 = vrot.lane.b32.xlu0 %v537, 64
    %v1025 = vpop.permute.xlu0 %1024
    %v1026 = vsel %vm687, %v1025, 0
    %v1028 = vsel %vm687, %v561, 0
    %1030 = vmatpush.xpose.msra.mxu0 0.0
    %1031 = vmatpush.xpose.msra.mxu0 0.0
    %1032 = vmatpush.xpose.msra.mxu0 0.0
    %1033 = vmatpush.xpose.msra.mxu0 0.0
    %1034 = vmatpush.xpose.msra.mxu0 0.0
    %1035 = vmatpush.xpose.msra.mxu0 0.0
    %1036 = vmatpush.xpose.msra.mxu0 0.0
    %1037 = vmatpush.xpose.msra.mxu0 0.0
    %1038 = vmatpush.xpose.msra.mxu0 0.0
    %1039 = vmatpush.xpose.msra.mxu0 0.0
    %1040 = vmatpush.xpose.msra.mxu0 0.0
    %1041 = vmatpush.xpose.msra.mxu0 0.0
    %1042 = vmatpush.xpose.msra.mxu0 0.0
    %1043 = vmatpush.xpose.msra.mxu0 0.0
    %1044 = vmatpush.xpose.msra.mxu0 0.0
    %1045 = vmatpush.xpose.msra.mxu0 %v1028
    %1046 = vmatmul.f32.gmra.mxu0 %v1026
    %v1047 = vpop.f32.mrf.mxu0
    %v1048 = vadd.f32 0.0, %v1047
    %1049 = vdwg.mxu0
    %1050 = vrot.lane.b32.xlu0 %v539, 64
    %v1051 = vpop.permute.xlu0 %1050
    %v1052 = vsel %vm687, %v1051, 0
    %v1054 = vsel %vm687, %v563, 0
    %1056 = vmatpush.xpose.msra.mxu0 0.0
    %1057 = vmatpush.xpose.msra.mxu0 0.0
    %1058 = vmatpush.xpose.msra.mxu0 0.0
    %1059 = vmatpush.xpose.msra.mxu0 0.0
    %1060 = vmatpush.xpose.msra.mxu0 0.0
    %1061 = vmatpush.xpose.msra.mxu0 0.0
    %1062 = vmatpush.xpose.msra.mxu0 0.0
    %1063 = vmatpush.xpose.msra.mxu0 0.0
    %1064 = vmatpush.xpose.msra.mxu0 0.0
    %1065 = vmatpush.xpose.msra.mxu0 0.0
    %1066 = vmatpush.xpose.msra.mxu0 0.0
    %1067 = vmatpush.xpose.msra.mxu0 0.0
    %1068 = vmatpush.xpose.msra.mxu0 0.0
    %1069 = vmatpush.xpose.msra.mxu0 0.0
    %1070 = vmatpush.xpose.msra.mxu0 0.0
    %1071 = vmatpush.xpose.msra.mxu0 %v1054
    %1072 = vmatmul.f32.gmra.mxu0 %v1052
    %v1073 = vpop.f32.mrf.mxu0
    %v1074 = vadd.f32 0.0, %v1073
    %1075 = vdwg.mxu0
    %1076 = vrot.lane.b32.xlu0 %v541, 64
    %v1077 = vpop.permute.xlu0 %1076
    %v1078 = vsel %vm687, %v1077, 0
    %v1080 = vsel %vm687, %v565, 0
    %1082 = vmatpush.xpose.msra.mxu0 0.0
    %1083 = vmatpush.xpose.msra.mxu0 0.0
    %1084 = vmatpush.xpose.msra.mxu0 0.0
    %1085 = vmatpush.xpose.msra.mxu0 0.0
    %1086 = vmatpush.xpose.msra.mxu0 0.0
    %1087 = vmatpush.xpose.msra.mxu0 0.0
    %1088 = vmatpush.xpose.msra.mxu0 0.0
    %1089 = vmatpush.xpose.msra.mxu0 0.0
    %1090 = vmatpush.xpose.msra.mxu0 0.0
    %1091 = vmatpush.xpose.msra.mxu0 0.0
    %1092 = vmatpush.xpose.msra.mxu0 0.0
    %1093 = vmatpush.xpose.msra.mxu0 0.0
    %1094 = vmatpush.xpose.msra.mxu0 0.0
    %1095 = vmatpush.xpose.msra.mxu0 0.0
    %1096 = vmatpush.xpose.msra.mxu0 0.0
    %1097 = vmatpush.xpose.msra.mxu0 %v1080
    %1098 = vmatmul.f32.gmra.mxu0 %v1078
    %v1099 = vpop.f32.mrf.mxu0
    %v1100 = vadd.f32 0.0, %v1099
    %1101 = vdwg.mxu0
    %vm1102 = vcmask 64512
    %v1103 = vsel %vm1102, %v710, -inf
    %1104 = vmax.xlane.f32.xlu0 %v1103
    %v1105 = vpop.xlane.xlu0 %1104
    %v1106 = vsel %vm1102, %v736, -inf
    %1107 = vmax.xlane.f32.xlu0 %v1106
    %v1108 = vpop.xlane.xlu0 %1107
    %v1109 = vsel %vm1102, %v762, -inf
    %1110 = vmax.xlane.f32.xlu0 %v1109
    %v1111 = vpop.xlane.xlu0 %1110
    %v1112 = vsel %vm1102, %v788, -inf
    %1113 = vmax.xlane.f32.xlu0 %v1112
    %v1114 = vpop.xlane.xlu0 %1113
    %v1115 = vsel %vm1102, %v814, -inf
    %1116 = vmax.xlane.f32.xlu0 %v1115
    %v1117 = vpop.xlane.xlu0 %1116
    %v1118 = vsel %vm1102, %v840, -inf
    %1119 = vmax.xlane.f32.xlu0 %v1118
    %v1120 = vpop.xlane.xlu0 %1119
    %v1121 = vsel %vm1102, %v866, -inf
    %1122 = vmax.xlane.f32.xlu0 %v1121
    %v1123 = vpop.xlane.xlu0 %1122
    %v1124 = vsel %vm1102, %v892, -inf
    %1125 = vmax.xlane.f32.xlu0 %v1124
    %v1126 = vpop.xlane.xlu0 %1125
    %v1127 = vsel %vm1102, %v918, -inf
    %1128 = vmax.xlane.f32.xlu0 %v1127
    %v1129 = vpop.xlane.xlu0 %1128
    %v1130 = vsel %vm1102, %v944, -inf
    %1131 = vmax.xlane.f32.xlu0 %v1130
    %v1132 = vpop.xlane.xlu0 %1131
    %v1133 = vsel %vm1102, %v970, -inf
    %1134 = vmax.xlane.f32.xlu0 %v1133
    %v1135 = vpop.xlane.xlu0 %1134
    %v1136 = vsel %vm1102, %v996, -inf
    %1137 = vmax.xlane.f32.xlu0 %v1136
    %v1138 = vpop.xlane.xlu0 %1137
    %v1139 = vsel %vm1102, %v1022, -inf
    %1140 = vmax.xlane.f32.xlu0 %v1139
    %v1141 = vpop.xlane.xlu0 %1140
    %v1142 = vsel %vm1102, %v1048, -inf
    %1143 = vmax.xlane.f32.xlu0 %v1142
    %v1144 = vpop.xlane.xlu0 %1143
    %v1145 = vsel %vm1102, %v1074, -inf
    %1146 = vmax.xlane.f32.xlu0 %v1145
    %v1147 = vpop.xlane.xlu0 %1146
    %v1148 = vsel %vm1102, %v1100, -inf
    %1149 = vmax.xlane.f32.xlu0 %v1148
    %v1150 = vpop.xlane.xlu0 %1149
    %v1151 = vsub.f32 %v710, %v1105
    %v1152 = vsub.f32 %v736, %v1108
    %v1153 = vsub.f32 %v762, %v1111
    %v1154 = vsub.f32 %v788, %v1114
    %v1155 = vsub.f32 %v814, %v1117
    %v1156 = vsub.f32 %v840, %v1120
    %v1157 = vsub.f32 %v866, %v1123
    %v1158 = vsub.f32 %v892, %v1126
    %v1159 = vsub.f32 %v918, %v1129
    %v1160 = vsub.f32 %v944, %v1132
    %v1161 = vsub.f32 %v970, %v1135
    %v1162 = vsub.f32 %v996, %v1138
    %v1163 = vsub.f32 %v1022, %v1141
    %v1164 = vsub.f32 %v1048, %v1144
    %v1165 = vsub.f32 %v1074, %v1147
    %v1166 = vsub.f32 %v1100, %v1150
    %v1167 = vmul.f32 %v1151, 1.442695
    %v1168 = vpow.pop %v1167
    %v1169 = vmul.f32 %v1152, 1.442695
    %v1170 = vpow.pop %v1169
    %v1171 = vmul.f32 %v1153, 1.442695
    %v1172 = vpow.pop %v1171
    %v1173 = vmul.f32 %v1154, 1.442695
    %v1174 = vpow.pop %v1173
    %v1175 = vmul.f32 %v1155, 1.442695
    %v1176 = vpow.pop %v1175
    %v1177 = vmul.f32 %v1156, 1.442695
    %v1178 = vpow.pop %v1177
    %v1179 = vmul.f32 %v1157, 1.442695
    %v1180 = vpow.pop %v1179
    %v1181 = vmul.f32 %v1158, 1.442695
    %v1182 = vpow.pop %v1181
    %v1183 = vmul.f32 %v1159, 1.442695
    %v1184 = vpow.pop %v1183
    %v1185 = vmul.f32 %v1160, 1.442695
    %v1186 = vpow.pop %v1185
    %v1187 = vmul.f32 %v1161, 1.442695
    %v1188 = vpow.pop %v1187
    %v1189 = vmul.f32 %v1162, 1.442695
    %v1190 = vpow.pop %v1189
    %v1191 = vmul.f32 %v1163, 1.442695
    %v1192 = vpow.pop %v1191
    %v1193 = vmul.f32 %v1164, 1.442695
    %v1194 = vpow.pop %v1193
    %v1195 = vmul.f32 %v1165, 1.442695
    %v1196 = vpow.pop %v1195
    %v1197 = vmul.f32 %v1166, 1.442695
    %v1198 = vpow.pop %v1197
    %v1199 = vsel %vm1102, %v1168, 0.0
    %1200 = vadd.xlane.f32.xlu0 %v1199
    %v1201 = vpop.xlane.xlu0 %1200
    %v1202 = vsel %vm1102, %v1170, 0.0
    %1203 = vadd.xlane.f32.xlu0 %v1202
    %v1204 = vpop.xlane.xlu0 %1203
    %v1205 = vsel %vm1102, %v1172, 0.0
    %1206 = vadd.xlane.f32.xlu0 %v1205
    %v1207 = vpop.xlane.xlu0 %1206
    %v1208 = vsel %vm1102, %v1174, 0.0
    %1209 = vadd.xlane.f32.xlu0 %v1208
    %v1210 = vpop.xlane.xlu0 %1209
    %v1211 = vsel %vm1102, %v1176, 0.0
    %1212 = vadd.xlane.f32.xlu0 %v1211
    %v1213 = vpop.xlane.xlu0 %1212
    %v1214 = vsel %vm1102, %v1178, 0.0
    %1215 = vadd.xlane.f32.xlu0 %v1214
    %v1216 = vpop.xlane.xlu0 %1215
    %v1217 = vsel %vm1102, %v1180, 0.0
    %1218 = vadd.xlane.f32.xlu0 %v1217
    %v1219 = vpop.xlane.xlu0 %1218
    %v1220 = vsel %vm1102, %v1182, 0.0
    %1221 = vadd.xlane.f32.xlu0 %v1220
    %v1222 = vpop.xlane.xlu0 %1221
    %v1223 = vsel %vm1102, %v1184, 0.0
    %1224 = vadd.xlane.f32.xlu0 %v1223
    %v1225 = vpop.xlane.xlu0 %1224
    %v1226 = vsel %vm1102, %v1186, 0.0
    %1227 = vadd.xlane.f32.xlu0 %v1226
    %v1228 = vpop.xlane.xlu0 %1227
    %v1229 = vsel %vm1102, %v1188, 0.0
    %1230 = vadd.xlane.f32.xlu0 %v1229
    %v1231 = vpop.xlane.xlu0 %1230
    %v1232 = vsel %vm1102, %v1190, 0.0
    %1233 = vadd.xlane.f32.xlu0 %v1232
    %v1234 = vpop.xlane.xlu0 %1233
    %v1235 = vsel %vm1102, %v1192, 0.0
    %1236 = vadd.xlane.f32.xlu0 %v1235
    %v1237 = vpop.xlane.xlu0 %1236
    %v1238 = vsel %vm1102, %v1194, 0.0
    %1239 = vadd.xlane.f32.xlu0 %v1238
    %v1240 = vpop.xlane.xlu0 %1239
    %v1241 = vsel %vm1102, %v1196, 0.0
    %1242 = vadd.xlane.f32.xlu0 %v1241
    %v1243 = vpop.xlane.xlu0 %1242
    %v1244 = vsel %vm1102, %v1198, 0.0
    %1245 = vadd.xlane.f32.xlu0 %v1244
    %v1246 = vpop.xlane.xlu0 %1245
    %v1247 = vrcp.pop %v1201
    %v1248 = vrcp.pop %v1204
    %v1249 = vrcp.pop %v1207
    %v1250 = vrcp.pop %v1210
    %v1251 = vrcp.pop %v1213
    %v1252 = vrcp.pop %v1216
    %v1253 = vrcp.pop %v1219
    %v1254 = vrcp.pop %v1222
    %v1255 = vrcp.pop %v1225
    %v1256 = vrcp.pop %v1228
    %v1257 = vrcp.pop %v1231
    %v1258 = vrcp.pop %v1234
    %v1259 = vrcp.pop %v1237
    %v1260 = vrcp.pop %v1240
    %v1261 = vrcp.pop %v1243
    %v1262 = vrcp.pop %v1246
    %v1263 = vmul.f32 %v1168, %v1247
    %v1264 = vmul.f32 %v1170, %v1248
    %v1265 = vmul.f32 %v1172, %v1249
    %v1266 = vmul.f32 %v1174, %v1250
    %v1267 = vmul.f32 %v1176, %v1251
    %v1268 = vmul.f32 %v1178, %v1252
    %v1269 = vmul.f32 %v1180, %v1253
    %v1270 = vmul.f32 %v1182, %v1254
    %v1271 = vmul.f32 %v1184, %v1255
    %v1272 = vmul.f32 %v1186, %v1256
    %v1273 = vmul.f32 %v1188, %v1257
    %v1274 = vmul.f32 %v1190, %v1258
    %v1275 = vmul.f32 %v1192, %v1259
    %v1276 = vmul.f32 %v1194, %v1260
    %v1277 = vmul.f32 %v1196, %v1261
    %v1278 = vmul.f32 %v1198, %v1262
    %v1279 = vrot.slane %v645, 1
    %v1280 = vrot.slane %v645, 2
    %v1281 = vrot.slane %v645, 3
    %v1282 = vrot.slane %v645, 4
    %v1283 = vrot.slane %v645, 5
    %v1284 = vrot.slane %v645, 6
    %v1285 = vrot.slane %v645, 7
    %v1286 = vrot.slane %v684, 1
    %v1287 = vrot.slane %v684, 2
    %v1288 = vrot.slane %v684, 3
    %v1289 = vrot.slane %v684, 4
    %v1290 = vrot.slane %v684, 5
    %v1291 = vrot.slane %v684, 6
    %v1292 = vrot.slane %v684, 7
    %v1293 = vperm.slane %v645, 0
    %v1294 = vperm.slane %v1279, 0
    %v1295 = vperm.slane %v1280, 0
    %v1296 = vperm.slane %v1281, 0
    %v1297 = vperm.slane %v1282, 0
    %v1298 = vperm.slane %v1283, 0
    %v1299 = vperm.slane %v1284, 0
    %v1300 = vperm.slane %v1285, 0
    %v1301 = vperm.slane %v684, 0
    %v1302 = vperm.slane %v1286, 0
    %v1303 = vperm.slane %v1287, 0
    %v1304 = vperm.slane %v1288, 0
    %v1305 = vperm.slane %v1289, 0
    %v1306 = vperm.slane %v1290, 0
    %v1307 = vperm.slane %v1291, 0
    %v1308 = vperm.slane %v1292, 0
    %v1325 = vadd.f32 %v1263, %v1293
    %v1326 = vadd.f32 %v1264, %v1294
    %v1327 = vadd.f32 %v1265, %v1295
    %v1328 = vadd.f32 %v1266, %v1296
    %v1329 = vadd.f32 %v1267, %v1297
    %v1330 = vadd.f32 %v1268, %v1298
    %v1331 = vadd.f32 %v1269, %v1299
    %v1332 = vadd.f32 %v1270, %v1300
    %v1333 = vadd.f32 %v1271, %v1301
    %v1334 = vadd.f32 %v1272, %v1302
    %v1335 = vadd.f32 %v1273, %v1303
    %v1336 = vadd.f32 %v1274, %v1304
    %v1337 = vadd.f32 %v1275, %v1305
    %v1338 = vadd.f32 %v1276, %v1306
    %v1339 = vadd.f32 %v1277, %v1307
    %v1340 = vadd.f32 %v1278, %v1308
    %1341 = vrot.lane.b32.xlu0 %v164, 64
    %v1342 = vpop.permute.xlu0 %1341
    %v1345 = vsel %vm1102, %v1325, 0
    %1347 = vmatpush.msra.mxu0 0.0
    %1348 = vmatpush.msra.mxu0 0.0
    %1349 = vmatpush.msra.mxu0 0.0
    %1350 = vmatpush.msra.mxu0 0.0
    %1351 = vmatpush.msra.mxu0 0.0
    %1352 = vmatpush.msra.mxu0 0.0
    %1353 = vmatpush.msra.mxu0 0.0
    %1354 = vmatpush.msra.mxu0 0.0
    %1355 = vmatpush.msra.mxu0 0.0
    %1356 = vmatpush.msra.mxu0 0.0
    %1357 = vmatpush.msra.mxu0 0.0
    %1358 = vmatpush.msra.mxu0 0.0
    %1359 = vmatpush.msra.mxu0 0.0
    %1360 = vmatpush.msra.mxu0 0.0
    %1361 = vmatpush.msra.mxu0 0.0
    %1362 = vmatpush.msra.mxu0 %v1342
    %1363 = vmatmul.f32.gmra.mxu0 %v1345
    %v1364 = vpop.f32.mrf.mxu0
    %v1365 = vadd.f32 0.0, %v1364
    %1366 = vdwg.mxu0
    %1367 = vrot.lane.b32.xlu0 %v166, 64
    %v1368 = vpop.permute.xlu0 %1367
    %v1371 = vsel %vm1102, %v1326, 0
    %1373 = vmatpush.msra.mxu0 0.0
    %1374 = vmatpush.msra.mxu0 0.0
    %1375 = vmatpush.msra.mxu0 0.0
    %1376 = vmatpush.msra.mxu0 0.0
    %1377 = vmatpush.msra.mxu0 0.0
    %1378 = vmatpush.msra.mxu0 0.0
    %1379 = vmatpush.msra.mxu0 0.0
    %1380 = vmatpush.msra.mxu0 0.0
    %1381 = vmatpush.msra.mxu0 0.0
    %1382 = vmatpush.msra.mxu0 0.0
    %1383 = vmatpush.msra.mxu0 0.0
    %1384 = vmatpush.msra.mxu0 0.0
    %1385 = vmatpush.msra.mxu0 0.0
    %1386 = vmatpush.msra.mxu0 0.0
    %1387 = vmatpush.msra.mxu0 0.0
    %1388 = vmatpush.msra.mxu0 %v1368
    %1389 = vmatmul.f32.gmra.mxu0 %v1371
    %v1390 = vpop.f32.mrf.mxu0
    %v1391 = vadd.f32 0.0, %v1390
    %1392 = vdwg.mxu0
    %1393 = vrot.lane.b32.xlu0 %v169, 64
    %v1394 = vpop.permute.xlu0 %1393
    %v1397 = vsel %vm1102, %v1327, 0
    %1399 = vmatpush.msra.mxu0 0.0
    %1400 = vmatpush.msra.mxu0 0.0
    %1401 = vmatpush.msra.mxu0 0.0
    %1402 = vmatpush.msra.mxu0 0.0
    %1403 = vmatpush.msra.mxu0 0.0
    %1404 = vmatpush.msra.mxu0 0.0
    %1405 = vmatpush.msra.mxu0 0.0
    %1406 = vmatpush.msra.mxu0 0.0
    %1407 = vmatpush.msra.mxu0 0.0
    %1408 = vmatpush.msra.mxu0 0.0
    %1409 = vmatpush.msra.mxu0 0.0
    %1410 = vmatpush.msra.mxu0 0.0
    %1411 = vmatpush.msra.mxu0 0.0
    %1412 = vmatpush.msra.mxu0 0.0
    %1413 = vmatpush.msra.mxu0 0.0
    %1414 = vmatpush.msra.mxu0 %v1394
    %1415 = vmatmul.f32.gmra.mxu0 %v1397
    %v1416 = vpop.f32.mrf.mxu0
    %v1417 = vadd.f32 0.0, %v1416
    %1418 = vdwg.mxu0
    %1419 = vrot.lane.b32.xlu0 %v171, 64
    %v1420 = vpop.permute.xlu0 %1419
    %v1423 = vsel %vm1102, %v1328, 0
    %1425 = vmatpush.msra.mxu0 0.0
    %1426 = vmatpush.msra.mxu0 0.0
    %1427 = vmatpush.msra.mxu0 0.0
    %1428 = vmatpush.msra.mxu0 0.0
    %1429 = vmatpush.msra.mxu0 0.0
    %1430 = vmatpush.msra.mxu0 0.0
    %1431 = vmatpush.msra.mxu0 0.0
    %1432 = vmatpush.msra.mxu0 0.0
    %1433 = vmatpush.msra.mxu0 0.0
    %1434 = vmatpush.msra.mxu0 0.0
    %1435 = vmatpush.msra.mxu0 0.0
    %1436 = vmatpush.msra.mxu0 0.0
    %1437 = vmatpush.msra.mxu0 0.0
    %1438 = vmatpush.msra.mxu0 0.0
    %1439 = vmatpush.msra.mxu0 0.0
    %1440 = vmatpush.msra.mxu0 %v1420
    %1441 = vmatmul.f32.gmra.mxu0 %v1423
    %v1442 = vpop.f32.mrf.mxu0
    %v1443 = vadd.f32 0.0, %v1442
    %1444 = vdwg.mxu0
    %1445 = vrot.lane.b32.xlu0 %v174, 64
    %v1446 = vpop.permute.xlu0 %1445
    %v1449 = vsel %vm1102, %v1329, 0
    %1451 = vmatpush.msra.mxu0 0.0
    %1452 = vmatpush.msra.mxu0 0.0
    %1453 = vmatpush.msra.mxu0 0.0
    %1454 = vmatpush.msra.mxu0 0.0
    %1455 = vmatpush.msra.mxu0 0.0
    %1456 = vmatpush.msra.mxu0 0.0
    %1457 = vmatpush.msra.mxu0 0.0
    %1458 = vmatpush.msra.mxu0 0.0
    %1459 = vmatpush.msra.mxu0 0.0
    %1460 = vmatpush.msra.mxu0 0.0
    %1461 = vmatpush.msra.mxu0 0.0
    %1462 = vmatpush.msra.mxu0 0.0
    %1463 = vmatpush.msra.mxu0 0.0
    %1464 = vmatpush.msra.mxu0 0.0
    %1465 = vmatpush.msra.mxu0 0.0
    %1466 = vmatpush.msra.mxu0 %v1446
    %1467 = vmatmul.f32.gmra.mxu0 %v1449
    %v1468 = vpop.f32.mrf.mxu0
    %v1469 = vadd.f32 0.0, %v1468
    %1470 = vdwg.mxu0
    %1471 = vrot.lane.b32.xlu0 %v176, 64
    %v1472 = vpop.permute.xlu0 %1471
    %v1475 = vsel %vm1102, %v1330, 0
    %1477 = vmatpush.msra.mxu0 0.0
    %1478 = vmatpush.msra.mxu0 0.0
    %1479 = vmatpush.msra.mxu0 0.0
    %1480 = vmatpush.msra.mxu0 0.0
    %1481 = vmatpush.msra.mxu0 0.0
    %1482 = vmatpush.msra.mxu0 0.0
    %1483 = vmatpush.msra.mxu0 0.0
    %1484 = vmatpush.msra.mxu0 0.0
    %1485 = vmatpush.msra.mxu0 0.0
    %1486 = vmatpush.msra.mxu0 0.0
    %1487 = vmatpush.msra.mxu0 0.0
    %1488 = vmatpush.msra.mxu0 0.0
    %1489 = vmatpush.msra.mxu0 0.0
    %1490 = vmatpush.msra.mxu0 0.0
    %1491 = vmatpush.msra.mxu0 0.0
    %1492 = vmatpush.msra.mxu0 %v1472
    %1493 = vmatmul.f32.gmra.mxu0 %v1475
    %v1494 = vpop.f32.mrf.mxu0
    %v1495 = vadd.f32 0.0, %v1494
    %1496 = vdwg.mxu0
    %1497 = vrot.lane.b32.xlu0 %v179, 64
    %v1498 = vpop.permute.xlu0 %1497
    %v1501 = vsel %vm1102, %v1331, 0
    %1503 = vmatpush.msra.mxu0 0.0
    %1504 = vmatpush.msra.mxu0 0.0
    %1505 = vmatpush.msra.mxu0 0.0
    %1506 = vmatpush.msra.mxu0 0.0
    %1507 = vmatpush.msra.mxu0 0.0
    %1508 = vmatpush.msra.mxu0 0.0
    %1509 = vmatpush.msra.mxu0 0.0
    %1510 = vmatpush.msra.mxu0 0.0
    %1511 = vmatpush.msra.mxu0 0.0
    %1512 = vmatpush.msra.mxu0 0.0
    %1513 = vmatpush.msra.mxu0 0.0
    %1514 = vmatpush.msra.mxu0 0.0
    %1515 = vmatpush.msra.mxu0 0.0
    %1516 = vmatpush.msra.mxu0 0.0
    %1517 = vmatpush.msra.mxu0 0.0
    %1518 = vmatpush.msra.mxu0 %v1498
    %1519 = vmatmul.f32.gmra.mxu0 %v1501
    %v1520 = vpop.f32.mrf.mxu0
    %v1521 = vadd.f32 0.0, %v1520
    %1522 = vdwg.mxu0
    %1523 = vrot.lane.b32.xlu0 %v181, 64
    %v1524 = vpop.permute.xlu0 %1523
    %v1527 = vsel %vm1102, %v1332, 0
    %1529 = vmatpush.msra.mxu0 0.0
    %1530 = vmatpush.msra.mxu0 0.0
    %1531 = vmatpush.msra.mxu0 0.0
    %1532 = vmatpush.msra.mxu0 0.0
    %1533 = vmatpush.msra.mxu0 0.0
    %1534 = vmatpush.msra.mxu0 0.0
    %1535 = vmatpush.msra.mxu0 0.0
    %1536 = vmatpush.msra.mxu0 0.0
    %1537 = vmatpush.msra.mxu0 0.0
    %1538 = vmatpush.msra.mxu0 0.0
    %1539 = vmatpush.msra.mxu0 0.0
    %1540 = vmatpush.msra.mxu0 0.0
    %1541 = vmatpush.msra.mxu0 0.0
    %1542 = vmatpush.msra.mxu0 0.0
    %1543 = vmatpush.msra.mxu0 0.0
    %1544 = vmatpush.msra.mxu0 %v1524
    %1545 = vmatmul.f32.gmra.mxu0 %v1527
    %v1546 = vpop.f32.mrf.mxu0
    %v1547 = vadd.f32 0.0, %v1546
    %1548 = vdwg.mxu0
    %1549 = vrot.lane.b32.xlu0 %v575, 64
    %v1550 = vpop.permute.xlu0 %1549
    %v1553 = vsel %vm1102, %v1333, 0
    %1555 = vmatpush.msra.mxu0 0.0
    %1556 = vmatpush.msra.mxu0 0.0
    %1557 = vmatpush.msra.mxu0 0.0
    %1558 = vmatpush.msra.mxu0 0.0
    %1559 = vmatpush.msra.mxu0 0.0
    %1560 = vmatpush.msra.mxu0 0.0
    %1561 = vmatpush.msra.mxu0 0.0
    %1562 = vmatpush.msra.mxu0 0.0
    %1563 = vmatpush.msra.mxu0 0.0
    %1564 = vmatpush.msra.mxu0 0.0
    %1565 = vmatpush.msra.mxu0 0.0
    %1566 = vmatpush.msra.mxu0 0.0
    %1567 = vmatpush.msra.mxu0 0.0
    %1568 = vmatpush.msra.mxu0 0.0
    %1569 = vmatpush.msra.mxu0 0.0
    %1570 = vmatpush.msra.mxu0 %v1550
    %1571 = vmatmul.f32.gmra.mxu0 %v1553
    %v1572 = vpop.f32.mrf.mxu0
    %v1573 = vadd.f32 0.0, %v1572
    %1574 = vdwg.mxu0
    %1575 = vrot.lane.b32.xlu0 %v577, 64
    %v1576 = vpop.permute.xlu0 %1575
    %v1579 = vsel %vm1102, %v1334, 0
    %1581 = vmatpush.msra.mxu0 0.0
    %1582 = vmatpush.msra.mxu0 0.0
    %1583 = vmatpush.msra.mxu0 0.0
    %1584 = vmatpush.msra.mxu0 0.0
    %1585 = vmatpush.msra.mxu0 0.0
    %1586 = vmatpush.msra.mxu0 0.0
    %1587 = vmatpush.msra.mxu0 0.0
    %1588 = vmatpush.msra.mxu0 0.0
    %1589 = vmatpush.msra.mxu0 0.0
    %1590 = vmatpush.msra.mxu0 0.0
    %1591 = vmatpush.msra.mxu0 0.0
    %1592 = vmatpush.msra.mxu0 0.0
    %1593 = vmatpush.msra.mxu0 0.0
    %1594 = vmatpush.msra.mxu0 0.0
    %1595 = vmatpush.msra.mxu0 0.0
    %1596 = vmatpush.msra.mxu0 %v1576
    %1597 = vmatmul.f32.gmra.mxu0 %v1579
    %v1598 = vpop.f32.mrf.mxu0
    %v1599 = vadd.f32 0.0, %v1598
    %1600 = vdwg.mxu0
    %1601 = vrot.lane.b32.xlu0 %v579, 64
    %v1602 = vpop.permute.xlu0 %1601
    %v1605 = vsel %vm1102, %v1335, 0
    %1607 = vmatpush.msra.mxu0 0.0
    %1608 = vmatpush.msra.mxu0 0.0
    %1609 = vmatpush.msra.mxu0 0.0
    %1610 = vmatpush.msra.mxu0 0.0
    %1611 = vmatpush.msra.mxu0 0.0
    %1612 = vmatpush.msra.mxu0 0.0
    %1613 = vmatpush.msra.mxu0 0.0
    %1614 = vmatpush.msra.mxu0 0.0
    %1615 = vmatpush.msra.mxu0 0.0
    %1616 = vmatpush.msra.mxu0 0.0
    %1617 = vmatpush.msra.mxu0 0.0
    %1618 = vmatpush.msra.mxu0 0.0
    %1619 = vmatpush.msra.mxu0 0.0
    %1620 = vmatpush.msra.mxu0 0.0
    %1621 = vmatpush.msra.mxu0 0.0
    %1622 = vmatpush.msra.mxu0 %v1602
    %1623 = vmatmul.f32.gmra.mxu0 %v1605
    %v1624 = vpop.f32.mrf.mxu0
    %v1625 = vadd.f32 0.0, %v1624
    %1626 = vdwg.mxu0
    %1627 = vrot.lane.b32.xlu0 %v581, 64
    %v1628 = vpop.permute.xlu0 %1627
    %v1631 = vsel %vm1102, %v1336, 0
    %1633 = vmatpush.msra.mxu0 0.0
    %1634 = vmatpush.msra.mxu0 0.0
    %1635 = vmatpush.msra.mxu0 0.0
    %1636 = vmatpush.msra.mxu0 0.0
    %1637 = vmatpush.msra.mxu0 0.0
    %1638 = vmatpush.msra.mxu0 0.0
    %1639 = vmatpush.msra.mxu0 0.0
    %1640 = vmatpush.msra.mxu0 0.0
    %1641 = vmatpush.msra.mxu0 0.0
    %1642 = vmatpush.msra.mxu0 0.0
    %1643 = vmatpush.msra.mxu0 0.0
    %1644 = vmatpush.msra.mxu0 0.0
    %1645 = vmatpush.msra.mxu0 0.0
    %1646 = vmatpush.msra.mxu0 0.0
    %1647 = vmatpush.msra.mxu0 0.0
    %1648 = vmatpush.msra.mxu0 %v1628
    %1649 = vmatmul.f32.gmra.mxu0 %v1631
    %v1650 = vpop.f32.mrf.mxu0
    %v1651 = vadd.f32 0.0, %v1650
    %1652 = vdwg.mxu0
    %1653 = vrot.lane.b32.xlu0 %v583, 64
    %v1654 = vpop.permute.xlu0 %1653
    %v1657 = vsel %vm1102, %v1337, 0
    %1659 = vmatpush.msra.mxu0 0.0
    %1660 = vmatpush.msra.mxu0 0.0
    %1661 = vmatpush.msra.mxu0 0.0
    %1662 = vmatpush.msra.mxu0 0.0
    %1663 = vmatpush.msra.mxu0 0.0
    %1664 = vmatpush.msra.mxu0 0.0
    %1665 = vmatpush.msra.mxu0 0.0
    %1666 = vmatpush.msra.mxu0 0.0
    %1667 = vmatpush.msra.mxu0 0.0
    %1668 = vmatpush.msra.mxu0 0.0
    %1669 = vmatpush.msra.mxu0 0.0
    %1670 = vmatpush.msra.mxu0 0.0
    %1671 = vmatpush.msra.mxu0 0.0
    %1672 = vmatpush.msra.mxu0 0.0
    %1673 = vmatpush.msra.mxu0 0.0
    %1674 = vmatpush.msra.mxu0 %v1654
    %1675 = vmatmul.f32.gmra.mxu0 %v1657
    %v1676 = vpop.f32.mrf.mxu0
    %v1677 = vadd.f32 0.0, %v1676
    %1678 = vdwg.mxu0
    %1679 = vrot.lane.b32.xlu0 %v585, 64
    %v1680 = vpop.permute.xlu0 %1679
    %v1683 = vsel %vm1102, %v1338, 0
    %1685 = vmatpush.msra.mxu0 0.0
    %1686 = vmatpush.msra.mxu0 0.0
    %1687 = vmatpush.msra.mxu0 0.0
    %1688 = vmatpush.msra.mxu0 0.0
    %1689 = vmatpush.msra.mxu0 0.0
    %1690 = vmatpush.msra.mxu0 0.0
    %1691 = vmatpush.msra.mxu0 0.0
    %1692 = vmatpush.msra.mxu0 0.0
    %1693 = vmatpush.msra.mxu0 0.0
    %1694 = vmatpush.msra.mxu0 0.0
    %1695 = vmatpush.msra.mxu0 0.0
    %1696 = vmatpush.msra.mxu0 0.0
    %1697 = vmatpush.msra.mxu0 0.0
    %1698 = vmatpush.msra.mxu0 0.0
    %1699 = vmatpush.msra.mxu0 0.0
    %1700 = vmatpush.msra.mxu0 %v1680
    %1701 = vmatmul.f32.gmra.mxu0 %v1683
    %v1702 = vpop.f32.mrf.mxu0
    %v1703 = vadd.f32 0.0, %v1702
    %1704 = vdwg.mxu0
    %1705 = vrot.lane.b32.xlu0 %v587, 64
    %v1706 = vpop.permute.xlu0 %1705
    %v1709 = vsel %vm1102, %v1339, 0
    %1711 = vmatpush.msra.mxu0 0.0
    %1712 = vmatpush.msra.mxu0 0.0
    %1713 = vmatpush.msra.mxu0 0.0
    %1714 = vmatpush.msra.mxu0 0.0
    %1715 = vmatpush.msra.mxu0 0.0
    %1716 = vmatpush.msra.mxu0 0.0
    %1717 = vmatpush.msra.mxu0 0.0
    %1718 = vmatpush.msra.mxu0 0.0
    %1719 = vmatpush.msra.mxu0 0.0
    %1720 = vmatpush.msra.mxu0 0.0
    %1721 = vmatpush.msra.mxu0 0.0
    %1722 = vmatpush.msra.mxu0 0.0
    %1723 = vmatpush.msra.mxu0 0.0
    %1724 = vmatpush.msra.mxu0 0.0
    %1725 = vmatpush.msra.mxu0 0.0
    %1726 = vmatpush.msra.mxu0 %v1706
    %1727 = vmatmul.f32.gmra.mxu0 %v1709
    %v1728 = vpop.f32.mrf.mxu0
    %v1729 = vadd.f32 0.0, %v1728
    %1730 = vdwg.mxu0
    %1731 = vrot.lane.b32.xlu0 %v589, 64
    %v1732 = vpop.permute.xlu0 %1731
    %v1735 = vsel %vm1102, %v1340, 0
    %1737 = vmatpush.msra.mxu0 0.0
    %1738 = vmatpush.msra.mxu0 0.0
    %1739 = vmatpush.msra.mxu0 0.0
    %1740 = vmatpush.msra.mxu0 0.0
    %1741 = vmatpush.msra.mxu0 0.0
    %1742 = vmatpush.msra.mxu0 0.0
    %1743 = vmatpush.msra.mxu0 0.0
    %1744 = vmatpush.msra.mxu0 0.0
    %1745 = vmatpush.msra.mxu0 0.0
    %1746 = vmatpush.msra.mxu0 0.0
    %1747 = vmatpush.msra.mxu0 0.0
    %1748 = vmatpush.msra.mxu0 0.0
    %1749 = vmatpush.msra.mxu0 0.0
    %1750 = vmatpush.msra.mxu0 0.0
    %1751 = vmatpush.msra.mxu0 0.0
    %1752 = vmatpush.msra.mxu0 %v1732
    %1753 = vmatmul.f32.gmra.mxu0 %v1735
    %v1754 = vpop.f32.mrf.mxu0
    %v1755 = vadd.f32 0.0, %v1754
    %1756 = vdwg.mxu0
    %1765 = vrot.lane.b32.xlu0 %v1573, 32
    %v1766 = vpop.permute.xlu0 %1765
    %1767 = vrot.lane.b32.xlu0 %v1599, 32
    %v1768 = vpop.permute.xlu0 %1767
    %1769 = vrot.lane.b32.xlu0 %v1625, 32
    %v1770 = vpop.permute.xlu0 %1769
    %1771 = vrot.lane.b32.xlu0 %v1651, 32
    %v1772 = vpop.permute.xlu0 %1771
    %1773 = vrot.lane.b32.xlu0 %v1677, 32
    %v1774 = vpop.permute.xlu0 %1773
    %1775 = vrot.lane.b32.xlu0 %v1703, 32
    %v1776 = vpop.permute.xlu0 %1775
    %1777 = vrot.lane.b32.xlu0 %v1729, 32
    %v1778 = vpop.permute.xlu0 %1777
    %1779 = vrot.lane.b32.xlu0 %v1755, 32
    %v1780 = vpop.permute.xlu0 %1779
    %v1789 = vsel %vm687, %v1365, %v1766
    %v1790 = vsel %vm687, %v1391, %v1768
    %v1791 = vsel %vm687, %v1417, %v1770
    %v1792 = vsel %vm687, %v1443, %v1772
    %v1793 = vsel %vm687, %v1469, %v1774
    %v1794 = vsel %vm687, %v1495, %v1776
    %v1795 = vsel %vm687, %v1521, %v1778
    %v1796 = vsel %vm687, %v1547, %v1780
    %v1797 = vadd.f32 %v1789, %v135
    %v1798 = vadd.f32 %v1790, %v137
    %v1799 = vadd.f32 %v1791, %v140
    %v1800 = vadd.f32 %v1792, %v142
    %v1801 = vadd.f32 %v1793, %v145
    %v1802 = vadd.f32 %v1794, %v147
    %v1803 = vadd.f32 %v1795, %v150
    %v1804 = vadd.f32 %v1796, %v152
    %v1805 = vsel %vm445, %v1797, 0.0
    %v1806 = vsel %vm445, %v1798, 0.0
    %v1807 = vsel %vm445, %v1799, 0.0
    %v1808 = vsel %vm445, %v1800, 0.0
    %v1809 = vsel %vm445, %v1801, 0.0
    %v1810 = vsel %vm445, %v1802, 0.0
    %v1811 = vsel %vm445, %v1803, 0.0
    %v1812 = vsel %vm445, %v1804, 0.0
    %1813 = vst [vmem:[#allocation2] sm:$0xff] %v1805
    %1814 = vst [vmem:[#allocation2 + $0x8] sm:$0xff] %v1806
    %1815 = vst [vmem:[#allocation2 + $0x10] sm:$0xff] %v1807
    %1816 = vst [vmem:[#allocation2 + $0x18] sm:$0xff] %v1808
    %1817 = vst [vmem:[#allocation2 + $0x20] sm:$0xff] %v1809
    %1818 = vst [vmem:[#allocation2 + $0x28] sm:$0xff] %v1810
    %1819 = vst [vmem:[#allocation2 + $0x30] sm:$0xff] %v1811
    %1820 = vst [vmem:[#allocation2 + $0x38] sm:$0xff] %v1812
    // Predicated region
    $region14: #{disentangled_self_attention.1} parent=1 // pred_check
      _
    $region15: #{disentangled_self_attention.1} parent=1 // pred_check_branch
      %1822 = sbr.rel (0) target = $region17
    $region16: #{disentangled_self_attention.1} parent=1 // pred_region
      %1824 = vsyncadd [#allocation3], 0
      %s1825 = sshll.u32 [#allocation2], 4
      %s1826 = int_to_ptr.vmem [resolvable:$true] %s1825
      %s1827 = sshll.u32 %s3, 4
      %s1828 = int_to_ptr.hbm [resolvable:$true] %s1827
      %1833 = dma.vmem_to_hbm [thread:$0]  %s1826, 1024, %s1828, [#allocation3], 128, 128, 8
    $region17: #{disentangled_self_attention.1} parent=1 // pred_fallthru
      _
    // Predicated region
    $region18: #{disentangled_self_attention.1} parent=1 // pred_check
      _
    $region19: #{disentangled_self_attention.1} parent=1 // pred_check_branch
      %1835 = sbr.rel (0) target = $region21
    $region20: #{disentangled_self_attention.1} parent=1 // pred_region
      %1837 = dma.done [#allocation3], 1024
    $region21: #{disentangled_self_attention.1} parent=1 // pred_fallthru
      _
    %1838 = vsyncpa [#allocation3], 1

</llo_original>
